<compile_context>
chip_gen: v5e
topology: v5e:2x2
jax: 0.10.0
libtpu: 0.0.40
codegen_flags: <defaults>
</compile_context>

<pallas_src>
import functools

import jax
import jax.numpy as jnp
import numpy as np
from jax.experimental import pallas as pl
from jax.experimental.pallas import tpu as pltpu

P = 128                      # lane width of every packed tile
BLOCK_B = 128                # batch rows per grid step (when B is large)
NEG = -1.0e30                # junk-lane logit value (exp underflows to 0)
WEIGHT_DTYPE = jnp.bfloat16  # weight *storage* dtype (compute stays f32)


# ----------------------------- Pallas kernel ------------------------------- #

def _fused_kernel(code_ref, node_ref, wc1_ref, wt1_ref, wg2_ref, wh_ref, b_ref,
                  out_ref, *, ch, fin):
    f32 = jnp.float32
    code = code_ref[...]
    node = node_ref[...]
    # bf16-stored weights -> f32 once; every dot accumulates in f32 and all
    # elementwise math (ReLU / bias / softmax) stays f32 (v5e has no bf16 VPU).
    wc1 = wc1_ref[...].astype(f32)
    wt1 = wt1_ref[...].astype(f32)
    wg2 = wg2_ref[...].astype(f32)
    wh = wh_ref[...].astype(f32)
    ball = b_ref[...]
    b1 = ball[0:1, :]
    bg2 = ball[1:2, :]
    bh = ball[2:3, :]

    # Layer 1, both branches fused onto one 128-lane hidden tile.
    # (node mean-pool is folded into wt1; code hidden -> lanes 0:ch,
    #  trans hidden -> lanes ch:ch+th, remaining lanes stay exactly 0)
    act1 = jnp.maximum(
        jnp.dot(code, wc1, preferred_element_type=f32)
        + jnp.dot(node, wt1, preferred_element_type=f32) + b1, 0.0)

    # Trans-branch layer 2: wg2 block sits at rows/cols ch:ch+th, so g2 lands
    # in its own lanes and the code lanes come out as exact zeros.
    g2 = jnp.maximum(jnp.dot(act1, wg2, preferred_element_type=f32) + bg2, 0.0)

    lane = jax.lax.broadcasted_iota(jnp.int32, act1.shape, 1)
    hcomb = jnp.where(lane < ch, act1, g2)      # [h1_code | g2 | 0 ...]

    # Single fused head: w2@linear_one, wgo@linear_one, w2@linear[:out] and
    # wgo@linear[out:] were composed at pack time, so the head columns already
    # produce the packed output layout [code | trans | final | NEG-pad].
    z = jnp.dot(hcomb, wh, preferred_element_type=f32) + bh

    # Grouped log_softmax over the three fin-wide lane groups of one tile.
    neg = jnp.float32(NEG)
    mc = lane < fin
    mt = (lane >= fin) & (lane < 2 * fin)
    mf = (lane >= 2 * fin) & (lane < 3 * fin)
    max_c = jnp.max(jnp.where(mc, z, neg), axis=-1, keepdims=True)
    max_t = jnp.max(jnp.where(mt, z, neg), axis=-1, keepdims=True)
    max_f = jnp.max(jnp.where(mf, z, neg), axis=-1, keepdims=True)
    m = jnp.where(mc, max_c, jnp.where(mt, max_t, max_f))
    e = jnp.exp(z - m)
    lse_c = jnp.log(jnp.sum(jnp.where(mc, e, 0.0), axis=-1, keepdims=True))
    lse_t = jnp.log(jnp.sum(jnp.where(mt, e, 0.0), axis=-1, keepdims=True))
    lse_f = jnp.log(jnp.sum(jnp.where(mf, e, 0.0), axis=-1, keepdims=True))
    lse = jnp.where(mc, lse_c, jnp.where(mt, lse_t, lse_f))

    out_ref[...] = z - m - lse


# ---------------------- one-time parameter packing -------------------------- #

def pack_params(p, n_nodes, weight_dtype=WEIGHT_DTYPE):
    """Pack module parameters into the kernel's fused/folded layout.

    Runs ONCE at setup (host-side numpy), NOT inside the jitted hot path.
    The unused lanes/rows of every slab are exact zeros (required so the
    NEG junk-lane bias trick and the lane-select stay correct).
    """
    w1 = np.asarray(p["w1"], np.float32); b1 = np.asarray(p["b1"], np.float32)
    w2 = np.asarray(p["w2"], np.float32); b2 = np.asarray(p["b2"], np.float32)
    wg1 = np.asarray(p["wg1"], np.float32); bg1 = np.asarray(p["bg1"], np.float32)
    wg2 = np.asarray(p["wg2"], np.float32); bg2 = np.asarray(p["bg2"], np.float32)
    wgo = np.asarray(p["wgo"], np.float32); bgo = np.asarray(p["bgo"], np.float32)
    wlo = np.asarray(p["wlo"], np.float32); blo = np.asarray(p["blo"], np.float32)
    wl = np.asarray(p["wl"], np.float32); bl = np.asarray(p["bl"], np.float32)

    ci, ch = w1.shape
    ti, th = wg1.shape
    out = w2.shape[1]
    fin = wlo.shape[1]
    nf = n_nodes * ti
    assert ch + th <= P, "both hiddens must fit one 128-lane tile"
    assert 3 * fin <= P, "three log-prob groups must fit one 128-lane tile"

    # Layer 1 (node mean-pool folded into the stacked per-node weights).
    wc1 = np.zeros((ci, P), np.float32)
    wc1[:, :ch] = w1
    wt1 = np.zeros((nf, P), np.float32)
    wt1[:, ch:ch + th] = np.tile(wg1, (n_nodes, 1)) / float(n_nodes)

    # Trans layer 2 (block at rows/cols ch:ch+th).
    wg2p = np.zeros((P, P), np.float32)
    wg2p[ch:ch + th, ch:ch + th] = wg2

    # Fused head: compose the purely-linear tail (w2 / wgo) with the heads.
    wh = np.zeros((P, P), np.float32)
    wh[:ch, 0:fin] = w2 @ wlo                          # code logits
    wh[ch:ch + th, fin:2 * fin] = wgo @ wlo            # trans logits
    wh[:ch, 2 * fin:3 * fin] = w2 @ wl[:out]           # final (code half)
    wh[ch:ch + th, 2 * fin:3 * fin] = wgo @ wl[out:]   # final (trans half)

    bias = np.zeros((8, P), np.float32)
    bias[0, :ch] = b1[0]
    bias[0, ch:ch + th] = bg1[0]
    bias[1, ch:ch + th] = bg2[0]
    bias[2, :] = NEG                                   # junk lanes -> -1e30
    bias[2, 0:fin] = (b2 @ wlo + blo)[0]
    bias[2, fin:2 * fin] = (bgo @ wlo + blo)[0]
    bias[2, 2 * fin:3 * fin] = (b2 @ wl[:out] + bgo @ wl[out:] + bl)[0]

    return {
        "wc1": jnp.asarray(wc1).astype(weight_dtype),
        "wt1": jnp.asarray(wt1).astype(weight_dtype),
        "wg2": jnp.asarray(wg2p).astype(weight_dtype),
        "whead": jnp.asarray(wh).astype(weight_dtype),
        "bias": jnp.asarray(bias),                     # biases stay f32
        "ch": int(ch), "fin": int(fin),
    }


# --------------------------------- wrapper ---------------------------------- #

@functools.partial(jax.jit, static_argnames=("ch", "fin", "block_b"))
def _forward(code_x, node_x, wc1, wt1, wg2, whead, bias, *, ch, fin, block_b):
    B = code_x.shape[0]
    node_flat = node_x.reshape(B, -1)                  # contiguous, free in XLA
    b_pad = ((B + block_b - 1) // block_b) * block_b
    if b_pad != B:
        code_x = jnp.pad(code_x, ((0, b_pad - B), (0, 0)))
        node_flat = jnp.pad(node_flat, ((0, b_pad - B), (0, 0)))

    ci = code_x.shape[1]
    nf = node_flat.shape[1]
    kernel = functools.partial(_fused_kernel, ch=ch, fin=fin)

    out = pl.pallas_call(
        kernel,
        out_shape=jax.ShapeDtypeStruct((b_pad, P), jnp.float32),
        grid=(b_pad // block_b,),
        in_specs=[
            pl.BlockSpec((block_b, ci), lambda i: (i, 0)),       # code features
            pl.BlockSpec((block_b, nf), lambda i: (i, 0)),       # node features
            pl.BlockSpec(wc1.shape, lambda i: (0, 0)),           # weights:
            pl.BlockSpec(wt1.shape, lambda i: (0, 0)),           #  constant block
            pl.BlockSpec(wg2.shape, lambda i: (0, 0)),           #  index -> fetched
            pl.BlockSpec(whead.shape, lambda i: (0, 0)),         #  once
            pl.BlockSpec(bias.shape, lambda i: (0, 0)),
        ],
        out_specs=pl.BlockSpec((block_b, P), lambda i: (i, 0)),
        compiler_params=pltpu.CompilerParams(
            dimension_semantics=("parallel",)),
    )(code_x, node_flat, wc1, wt1, wg2, whead, bias)

    return out[:B, 0:fin], out[:B, fin:2 * fin], out[:B, 2 * fin:3 * fin]


def all_concat_forward(code_x, node_x, packed):
    """Returns (code_prob, trans_prob, final_prob)."""
    B = code_x.shape[0]
    if B >= 2 * BLOCK_B:
        block_b = BLOCK_B                 # >=2 "parallel" steps -> both v7x TCs
    else:
        block_b = ((B + 7) // 8) * 8      # single step (v5e/v6e: no per-step tax)
    return _forward(code_x, node_x, packed["wc1"], packed["wt1"], packed["wg2"],
                    packed["whead"], packed["bias"],
                    ch=packed["ch"], fin=packed["fin"], block_b=block_b)


# ------------------------- parameter construction --------------------------- #

def init_params(key, *, trans_input_size, trans_hidden, code_input_size,
                code_hidden, output_size, final_size):
    ks = jax.random.split(key, 16)

    def lin(kw, kb, fan_in, fan_out):
        lim = 1.0 / np.sqrt(fan_in)
        w = jax.random.uniform(kw, (fan_in, fan_out), jnp.float32, -lim, lim)
        b = jax.random.uniform(kb, (1, fan_out), jnp.float32, -lim, lim)
        return w, b

    p = {}
    p["w1"], p["b1"] = lin(ks[0], ks[1], code_input_size, code_hidden)
    p["w2"], p["b2"] = lin(ks[2], ks[3], code_hidden, output_size)
    p["wg1"], p["bg1"] = lin(ks[4], ks[5], trans_input_size, trans_hidden)
    p["wg2"], p["bg2"] = lin(ks[6], ks[7], trans_hidden, trans_hidden)
    p["wgo"], p["bgo"] = lin(ks[8], ks[9], trans_hidden, output_size)
    p["wlo"], p["blo"] = lin(ks[10], ks[11], output_size, final_size)
    p["wl"], p["bl"] = lin(ks[12], ks[13], output_size + output_size, final_size)
    return p


# --------------------------- pure-JAX reference ------------------------------ #

def reference_forward(code_x, node_x, p):
    def lsm(x):
        return jax.nn.log_softmax(x, axis=-1)
    h = jnp.maximum(code_x @ p["w1"] + p["b1"], 0.0)
    code_emb = h @ p["w2"] + p["b2"]
    pooled = jnp.mean(node_x, axis=1)
    g = jnp.maximum(pooled @ p["wg1"] + p["bg1"], 0.0)
    g = jnp.maximum(g @ p["wg2"] + p["bg2"], 0.0)
    trans_emb = g @ p["wgo"] + p["bgo"]
    code_prob = lsm(code_emb @ p["wlo"] + p["blo"])
    trans_prob = lsm(trans_emb @ p["wlo"] + p["blo"])
    final_prob = lsm(jnp.concatenate([code_emb, trans_emb], 1) @ p["wl"] + p["bl"])
    return code_prob, trans_prob, final_prob


# ----------------------------------- main ------------------------------------ #

if __name__ == "__main__":
    # Batch matches the train-mask branch of the original module (256 graphs).
    B = 256
    N_NODES = 16
    TRANS_INPUT = 16
    TRANS_HIDDEN = 32
    CODE_INPUT = 32
    CODE_HIDDEN = 32
    OUTPUT_SIZE = 32
    FINAL_SIZE = 16

    key = jax.random.PRNGKey(0)
    k_code, k_node, k_param = jax.random.split(key, 3)

    code_x = jax.random.normal(k_code, (B, CODE_INPUT), jnp.float32)
    node_x = jax.random.normal(k_node, (B, N_NODES, TRANS_INPUT), jnp.float32)

    params = init_params(
        k_param,
        trans_input_size=TRANS_INPUT, trans_hidden=TRANS_HIDDEN,
        code_input_size=CODE_INPUT, code_hidden=CODE_HIDDEN,
        output_size=OUTPUT_SIZE, final_size=FINAL_SIZE,
    )

    packed = pack_params(params, N_NODES)       # once, outside the hot path

    outs = all_concat_forward(code_x, node_x, packed)
    outs = jax.block_until_ready(outs)

    refs = reference_forward(code_x, node_x, params)
    # Weights are *stored* in bf16 (accumulation & elementwise math are f32),
    # so compare against the f32 reference at a bf16-level tolerance; setting
    # WEIGHT_DTYPE = jnp.float32 recovers <5e-4 agreement.
    tol = 5e-4 if WEIGHT_DTYPE == jnp.float32 else 2e-2
    for o, r in zip(outs, refs):
        np.testing.assert_allclose(np.asarray(o), np.asarray(r),
                                   rtol=tol, atol=tol)

    print("KERNEL_OK")
</pallas_src>

<mosaic_0001>
module attributes {stable_mosaic.version = 11 : i64} {
  func.func @_fused_kernel(%arg0: i32, %arg1: memref<128x32xf32, #tpu.memory_space<vmem>>, %arg2: memref<128x256xf32, #tpu.memory_space<vmem>>, %arg3: memref<32x128xbf16, #tpu.memory_space<vmem>>, %arg4: memref<256x128xbf16, #tpu.memory_space<vmem>>, %arg5: memref<128x128xbf16, #tpu.memory_space<vmem>>, %arg6: memref<128x128xbf16, #tpu.memory_space<vmem>>, %arg7: memref<8x128xf32, #tpu.memory_space<vmem>>, %arg8: memref<128x128xf32, #tpu.memory_space<vmem>>) attributes {dimension_semantics = [#tpu.dimension_semantics<parallel>], iteration_bounds = array<i64: 2>, scalar_prefetch = 0 : i64, scratch_operands = 0 : i64, tpu.core_type = #tpu.core_type<tc>, window_params = [{transform_indices = @transform_0, window_bounds = array<i64: 128, 32>}, {transform_indices = @transform_1, window_bounds = array<i64: 128, 256>}, {pipeline_mode = #tpu.pipeline_mode<synchronous>, transform_indices = @transform_2, window_bounds = array<i64: 32, 128>}, {pipeline_mode = #tpu.pipeline_mode<synchronous>, transform_indices = @transform_3, window_bounds = array<i64: 256, 128>}, {pipeline_mode = #tpu.pipeline_mode<synchronous>, transform_indices = @transform_4, window_bounds = array<i64: 128, 128>}, {pipeline_mode = #tpu.pipeline_mode<synchronous>, transform_indices = @transform_5, window_bounds = array<i64: 128, 128>}, {pipeline_mode = #tpu.pipeline_mode<synchronous>, transform_indices = @transform_6, window_bounds = array<i64: 8, 128>}, {transform_indices = @transform_7, window_bounds = array<i64: 128, 128>}]} {
    %c0 = arith.constant 0 : index
    %c0_0 = arith.constant 0 : index
    %0 = vector.load %arg1[%c0, %c0_0] : memref<128x32xf32, #tpu.memory_space<vmem>>, vector<128x32xf32>
    %c0_1 = arith.constant 0 : index
    %c0_2 = arith.constant 0 : index
    %1 = vector.load %arg2[%c0_1, %c0_2] : memref<128x256xf32, #tpu.memory_space<vmem>>, vector<128x256xf32>
    %c0_3 = arith.constant 0 : index
    %c0_4 = arith.constant 0 : index
    %2 = vector.load %arg3[%c0_3, %c0_4] : memref<32x128xbf16, #tpu.memory_space<vmem>>, vector<32x128xbf16>
    %3 = arith.extf %2 : vector<32x128xbf16> to vector<32x128xf32>
    %c0_5 = arith.constant 0 : index
    %c0_6 = arith.constant 0 : index
    %4 = vector.load %arg4[%c0_5, %c0_6] : memref<256x128xbf16, #tpu.memory_space<vmem>>, vector<256x128xbf16>
    %5 = arith.extf %4 : vector<256x128xbf16> to vector<256x128xf32>
    %c0_7 = arith.constant 0 : index
    %c0_8 = arith.constant 0 : index
    %6 = vector.load %arg5[%c0_7, %c0_8] : memref<128x128xbf16, #tpu.memory_space<vmem>>, vector<128x128xbf16>
    %7 = arith.extf %6 : vector<128x128xbf16> to vector<128x128xf32>
    %c0_9 = arith.constant 0 : index
    %c0_10 = arith.constant 0 : index
    %8 = vector.load %arg6[%c0_9, %c0_10] : memref<128x128xbf16, #tpu.memory_space<vmem>>, vector<128x128xbf16>
    %9 = arith.extf %8 : vector<128x128xbf16> to vector<128x128xf32>
    %c0_11 = arith.constant 0 : index
    %c0_12 = arith.constant 0 : index
    %10 = vector.load %arg7[%c0_11, %c0_12] : memref<8x128xf32, #tpu.memory_space<vmem>>, vector<8x128xf32>
    %11 = vector.extract_strided_slice %10 {offsets = [0, 0], sizes = [1, 128], strides = [1, 1]} : vector<8x128xf32> to vector<1x128xf32>
    %12 = vector.extract_strided_slice %10 {offsets = [1, 0], sizes = [1, 128], strides = [1, 1]} : vector<8x128xf32> to vector<1x128xf32>
    %13 = vector.extract_strided_slice %10 {offsets = [2, 0], sizes = [1, 128], strides = [1, 1]} : vector<8x128xf32> to vector<1x128xf32>
    %cst = arith.constant dense<0.000000e+00> : vector<128x128xf32>
    %14 = tpu.matmul %0, %3, %cst {dimension_numbers = #tpu.dot_dimension_numbers<[1], [0], [0], [1], [0, 0, 1, 1], [], []>} : vector<128x32xf32>, vector<32x128xf32>, vector<128x128xf32> -> vector<128x128xf32>
    %cst_13 = arith.constant dense<0.000000e+00> : vector<128x128xf32>
    %15 = tpu.matmul %1, %5, %cst_13 {dimension_numbers = #tpu.dot_dimension_numbers<[1], [0], [0], [1], [0, 0, 1, 1], [], []>} : vector<128x256xf32>, vector<256x128xf32>, vector<128x128xf32> -> vector<128x128xf32>
    %16 = arith.addf %14, %15 : vector<128x128xf32>
    %17 = vector.broadcast %11 : vector<1x128xf32> to vector<128x128xf32>
    %18 = arith.addf %16, %17 : vector<128x128xf32>
    %cst_14 = arith.constant 0.000000e+00 : f32
    %19 = vector.broadcast %cst_14 : f32 to vector<128x128xf32>
    %20 = arith.maximumf %18, %19 : vector<128x128xf32>
    %cst_15 = arith.constant dense<0.000000e+00> : vector<128x128xf32>
    %21 = tpu.matmul %20, %7, %cst_15 {dimension_numbers = #tpu.dot_dimension_numbers<[1], [0], [0], [1], [0, 0, 1, 1], [], []>} : vector<128x128xf32>, vector<128x128xf32>, vector<128x128xf32> -> vector<128x128xf32>
    %22 = vector.broadcast %12 : vector<1x128xf32> to vector<128x128xf32>
    %23 = arith.addf %21, %22 : vector<128x128xf32>
    %cst_16 = arith.constant 0.000000e+00 : f32
    %24 = vector.broadcast %cst_16 : f32 to vector<128x128xf32>
    %25 = arith.maximumf %23, %24 : vector<128x128xf32>
    %26 = tpu.iota {dimensions = array<i32: 1>} : vector<128x128xi32>
    %c32_i32 = arith.constant 32 : i32
    %27 = vector.broadcast %c32_i32 : i32 to vector<128x128xi32>
    %28 = arith.cmpi slt, %26, %27 : vector<128x128xi32>
    %29 = arith.select %28, %20, %25 : vector<128x128xi1>, vector<128x128xf32>
    %cst_17 = arith.constant dense<0.000000e+00> : vector<128x128xf32>
    %30 = tpu.matmul %29, %9, %cst_17 {dimension_numbers = #tpu.dot_dimension_numbers<[1], [0], [0], [1], [0, 0, 1, 1], [], []>} : vector<128x128xf32>, vector<128x128xf32>, vector<128x128xf32> -> vector<128x128xf32>
    %31 = vector.broadcast %13 : vector<1x128xf32> to vector<128x128xf32>
    %32 = arith.addf %30, %31 : vector<128x128xf32>
    %c16_i32 = arith.constant 16 : i32
    %33 = vector.broadcast %c16_i32 : i32 to vector<128x128xi32>
    %34 = arith.cmpi slt, %26, %33 : vector<128x128xi32>
    %c16_i32_18 = arith.constant 16 : i32
    %35 = vector.broadcast %c16_i32_18 : i32 to vector<128x128xi32>
    %36 = arith.cmpi sge, %26, %35 : vector<128x128xi32>
    %c32_i32_19 = arith.constant 32 : i32
    %37 = vector.broadcast %c32_i32_19 : i32 to vector<128x128xi32>
    %38 = arith.cmpi slt, %26, %37 : vector<128x128xi32>
    %39 = arith.andi %36, %38 : vector<128x128xi1>
    %c32_i32_20 = arith.constant 32 : i32
    %40 = vector.broadcast %c32_i32_20 : i32 to vector<128x128xi32>
    %41 = arith.cmpi sge, %26, %40 : vector<128x128xi32>
    %c48_i32 = arith.constant 48 : i32
    %42 = vector.broadcast %c48_i32 : i32 to vector<128x128xi32>
    %43 = arith.cmpi slt, %26, %42 : vector<128x128xi32>
    %44 = arith.andi %41, %43 : vector<128x128xi1>
    %cst_21 = arith.constant -1.000000e+30 : f32
    %45 = vector.broadcast %cst_21 : f32 to vector<128x128xf32>
    %46 = arith.select %34, %32, %45 : vector<128x128xi1>, vector<128x128xf32>
    %cst_22 = arith.constant dense<0xFF800000> : vector<128xf32>
    %47 = vector.multi_reduction <maximumf>, %46, %cst_22 [1] : vector<128x128xf32> to vector<128xf32>
    %48 = vector.shape_cast %47 : vector<128xf32> to vector<128x1xf32>
    %cst_23 = arith.constant -1.000000e+30 : f32
    %49 = vector.broadcast %cst_23 : f32 to vector<128x128xf32>
    %50 = arith.select %39, %32, %49 : vector<128x128xi1>, vector<128x128xf32>
    %cst_24 = arith.constant dense<0xFF800000> : vector<128xf32>
    %51 = vector.multi_reduction <maximumf>, %50, %cst_24 [1] : vector<128x128xf32> to vector<128xf32>
    %52 = vector.shape_cast %51 : vector<128xf32> to vector<128x1xf32>
    %cst_25 = arith.constant -1.000000e+30 : f32
    %53 = vector.broadcast %cst_25 : f32 to vector<128x128xf32>
    %54 = arith.select %44, %32, %53 : vector<128x128xi1>, vector<128x128xf32>
    %cst_26 = arith.constant dense<0xFF800000> : vector<128xf32>
    %55 = vector.multi_reduction <maximumf>, %54, %cst_26 [1] : vector<128x128xf32> to vector<128xf32>
    %56 = vector.shape_cast %55 : vector<128xf32> to vector<128x1xf32>
    %57 = vector.shape_cast %52 : vector<128x1xf32> to vector<128x1xf32>
    %58 = vector.broadcast %57 : vector<128x1xf32> to vector<128x128xf32>
    %59 = vector.shape_cast %56 : vector<128x1xf32> to vector<128x1xf32>
    %60 = vector.broadcast %59 : vector<128x1xf32> to vector<128x128xf32>
    %61 = arith.select %39, %58, %60 : vector<128x128xi1>, vector<128x128xf32>
    %62 = vector.shape_cast %48 : vector<128x1xf32> to vector<128x1xf32>
    %63 = vector.broadcast %62 : vector<128x1xf32> to vector<128x128xf32>
    %64 = arith.select %34, %63, %61 : vector<128x128xi1>, vector<128x128xf32>
    %65 = arith.subf %32, %64 : vector<128x128xf32>
    %66 = math.exp %65 : vector<128x128xf32>
    %cst_27 = arith.constant 0.000000e+00 : f32
    %67 = vector.broadcast %cst_27 : f32 to vector<128x128xf32>
    %68 = arith.select %34, %66, %67 : vector<128x128xi1>, vector<128x128xf32>
    %cst_28 = arith.constant dense<0.000000e+00> : vector<128xf32>
    %69 = vector.multi_reduction <add>, %68, %cst_28 [1] : vector<128x128xf32> to vector<128xf32>
    %70 = vector.shape_cast %69 : vector<128xf32> to vector<128x1xf32>
    %71 = math.log %70 : vector<128x1xf32>
    %cst_29 = arith.constant 0.000000e+00 : f32
    %72 = vector.broadcast %cst_29 : f32 to vector<128x128xf32>
    %73 = arith.select %39, %66, %72 : vector<128x128xi1>, vector<128x128xf32>
    %cst_30 = arith.constant dense<0.000000e+00> : vector<128xf32>
    %74 = vector.multi_reduction <add>, %73, %cst_30 [1] : vector<128x128xf32> to vector<128xf32>
    %75 = vector.shape_cast %74 : vector<128xf32> to vector<128x1xf32>
    %76 = math.log %75 : vector<128x1xf32>
    %cst_31 = arith.constant 0.000000e+00 : f32
    %77 = vector.broadcast %cst_31 : f32 to vector<128x128xf32>
    %78 = arith.select %44, %66, %77 : vector<128x128xi1>, vector<128x128xf32>
    %cst_32 = arith.constant dense<0.000000e+00> : vector<128xf32>
    %79 = vector.multi_reduction <add>, %78, %cst_32 [1] : vector<128x128xf32> to vector<128xf32>
    %80 = vector.shape_cast %79 : vector<128xf32> to vector<128x1xf32>
    %81 = math.log %80 : vector<128x1xf32>
    %82 = vector.shape_cast %76 : vector<128x1xf32> to vector<128x1xf32>
    %83 = vector.broadcast %82 : vector<128x1xf32> to vector<128x128xf32>
    %84 = vector.shape_cast %81 : vector<128x1xf32> to vector<128x1xf32>
    %85 = vector.broadcast %84 : vector<128x1xf32> to vector<128x128xf32>
    %86 = arith.select %39, %83, %85 : vector<128x128xi1>, vector<128x128xf32>
    %87 = vector.shape_cast %71 : vector<128x1xf32> to vector<128x1xf32>
    %88 = vector.broadcast %87 : vector<128x1xf32> to vector<128x128xf32>
    %89 = arith.select %34, %88, %86 : vector<128x128xi1>, vector<128x128xf32>
    %90 = arith.subf %32, %64 : vector<128x128xf32>
    %91 = arith.subf %90, %89 : vector<128x128xf32>
    %c0_33 = arith.constant 0 : index
    %c0_34 = arith.constant 0 : index
    %92 = vector.load %arg8[%c0_33, %c0_34] : memref<128x128xf32, #tpu.memory_space<vmem>>, vector<128x128xf32>
    tpu.vector_store %arg8[%c0_33, %c0_34], %91 {strides = array<i32>} : memref<128x128xf32, #tpu.memory_space<vmem>>, vector<128x128xf32>,
    return
  }
  func.func @transform_0(%arg0: i32) -> (i32, i32) {
    %c0_i32 = arith.constant 0 : i32
    %c0_i32_0 = arith.constant 0 : i32
    return %arg0, %c0_i32 : i32, i32
  }
  func.func @transform_1(%arg0: i32) -> (i32, i32) {
    %c0_i32 = arith.constant 0 : i32
    %c0_i32_0 = arith.constant 0 : i32
    return %arg0, %c0_i32 : i32, i32
  }
  func.func @transform_2(%arg0: i32) -> (i32, i32) {
    %c0_i32 = arith.constant 0 : i32
    %c0_i32_0 = arith.constant 0 : i32
    %c0_i32_1 = arith.constant 0 : i32
    return %c0_i32, %c0_i32_0 : i32, i32
  }
  func.func @transform_3(%arg0: i32) -> (i32, i32) {
    %c0_i32 = arith.constant 0 : i32
    %c0_i32_0 = arith.constant 0 : i32
    %c0_i32_1 = arith.constant 0 : i32
    return %c0_i32, %c0_i32_0 : i32, i32
  }
  func.func @transform_4(%arg0: i32) -> (i32, i32) {
    %c0_i32 = arith.constant 0 : i32
    %c0_i32_0 = arith.constant 0 : i32
    %c0_i32_1 = arith.constant 0 : i32
    return %c0_i32, %c0_i32_0 : i32, i32
  }
  func.func @transform_5(%arg0: i32) -> (i32, i32) {
    %c0_i32 = arith.constant 0 : i32
    %c0_i32_0 = arith.constant 0 : i32
    %c0_i32_1 = arith.constant 0 : i32
    return %c0_i32, %c0_i32_0 : i32, i32
  }
  func.func @transform_6(%arg0: i32) -> (i32, i32) {
    %c0_i32 = arith.constant 0 : i32
    %c0_i32_0 = arith.constant 0 : i32
    %c0_i32_1 = arith.constant 0 : i32
    return %c0_i32, %c0_i32_0 : i32, i32
  }
  func.func @transform_7(%arg0: i32) -> (i32, i32) {
    %c0_i32 = arith.constant 0 : i32
    %c0_i32_0 = arith.constant 0 : i32
    return %arg0, %c0_i32 : i32, i32
  }
}

</mosaic_0001>

<llo_original>
// kernel: _forward.1
$region0: #{_forward.1}
  #allocation0 [shape = 'u32[]', space=smem, size = 0x4, offset = 0x4, fixed_abs, tag = 'smem constant byte address 0x4 - core index']
  #allocation1 [shape = 'u32[72,128]{1,0:T(1,128)}', space=vmem, size = 0x9000, scoped, tag = 'internal scratch']
  %s0 = inlined_call_operand.vmem [shape: f32[256,32], index: 0, kind: input, shape index: {}]
  %s1 = inlined_call_operand.vmem [shape: f32[256,256], index: 1, kind: input, shape index: {}]
  %s2 = inlined_call_operand.vmem [shape: bf16[32,128], index: 2, kind: input, shape index: {}]
  %s3 = inlined_call_operand.vmem [shape: bf16[256,128], index: 3, kind: input, shape index: {}]
  %s4 = inlined_call_operand.vmem [shape: bf16[128,128], index: 4, kind: input, shape index: {}]
  %s5 = inlined_call_operand.vmem [shape: bf16[128,128], index: 5, kind: input, shape index: {}]
  %s6 = inlined_call_operand.vmem [shape: f32[8,128], index: 6, kind: input, shape index: {}]
  %s7 = inlined_call_operand.vmem [shape: f32[256,128], index: 7, kind: output, shape index: {}]
  %s8 = sld [smem:[#allocation0]]
  $region61: #{_forward.1} parent=0
    _
  %s10 = ssub.s32 1, %s8
  %s11 = scalar_select 0, %s10, %s8
  loop: start=0, step=1, limit=4
  $region2: #{_forward.1} parent=0 // loop_pre_header
    _
  $region3: #{_forward.1} parent=0 // loop_header
    %s13 = sphi 0, %s17
    %p14 = scmp.ge.s32.totalorder %s13, 4
    %s23 = sphi 0, %s25
    %s26 = sphi 0, %s23
    %s27 = sphi 0, %s26
    %s43 = sphi 0, %s27
    %s49 = sphi 0, %s51
    %s52 = sphi 0, %s49
    %s53 = sphi 0, %s52
    %s69 = sphi 0, %s53
    %s73 = sphi 0, %s73
    %s75 = sphi 0, %s73
    %s76 = sphi 0, %s75
    %s90 = sphi 0, %s76
    %s94 = sphi 0, %s94
    %s96 = sphi 0, %s94
    %s97 = sphi 0, %s96
    %s111 = sphi 0, %s97
    %s115 = sphi 0, %s115
    %s117 = sphi 0, %s115
    %s118 = sphi 0, %s117
    %s132 = sphi 0, %s118
    %s136 = sphi 0, %s136
    %s138 = sphi 0, %s136
    %s139 = sphi 0, %s138
    %s153 = sphi 0, %s139
    %s157 = sphi 0, %s157
    %s159 = sphi 0, %s157
    %s160 = sphi 0, %s159
    %s174 = sphi 0, %s160
    %s180 = sphi 0, %s182
    %s183 = sphi 0, %s180
    %s184 = sphi 0, %s183
    %s200 = sphi 0, %s184
  $region4: #{_forward.1} parent=0 // loop_header_branch
    %16 = sbr.rel (%p14) target = $region8
  $region5: #{_forward.1} parent=0 // loop_body
    %s18 = ssub.s32 %s13, 1
    %s19 = ssub.s32 %s13, 2
    %s20 = sadd.s32 %s13, 1
    %s21 = ssub.s32 %s13, %s20
    %p22 = scmp.eq.s32.totalorder %s21, 0
    %s24 = sadd.s32 %s23, 1
    %s25 = scalar_select %p22, %s23, %s24
    %p28 = pneg %p22
    %p29 = scmp.eq.s32.totalorder %s13, 1
    %p30 = por %p28, %p29
    %p31 = scmp.ne.s32.totalorder %s23, %s26
    %p32 = scmp.eq.s32.totalorder %s13, 0
    %p33 = por %p31, %p32
    %p34 = scmp.ne.s32.totalorder %s23, %s26
    %p35 = scmp.eq.s32.totalorder %s18, 1
    %p36 = por %p34, %p35
    %p37 = scmp.ne.s32.totalorder %s26, %s27
    %p38 = scmp.eq.s32.totalorder %s18, 0
    %p39 = por %p37, %p38
    %p40 = scmp.ne.s32.totalorder %s26, %s27
    %p41 = scmp.eq.s32.totalorder %s19, 1
    %p42 = por %p40, %p41
    %p44 = scmp.ne.s32.totalorder %s27, %s43
    %p45 = scmp.eq.s32.totalorder %s19, 0
    %p46 = por %p44, %p45
    %s47 = ssub.s32 %s13, %s20
    %p48 = scmp.eq.s32.totalorder %s47, 0
    %s50 = sadd.s32 %s49, 1
    %s51 = scalar_select %p48, %s49, %s50
    %p54 = pneg %p48
    %p55 = scmp.eq.s32.totalorder %s13, 1
    %p56 = por %p54, %p55
    %p57 = scmp.ne.s32.totalorder %s49, %s52
    %p58 = scmp.eq.s32.totalorder %s13, 0
    %p59 = por %p57, %p58
    %p60 = scmp.ne.s32.totalorder %s49, %s52
    %p61 = scmp.eq.s32.totalorder %s18, 1
    %p62 = por %p60, %p61
    %p63 = scmp.ne.s32.totalorder %s52, %s53
    %p64 = scmp.eq.s32.totalorder %s18, 0
    %p65 = por %p63, %p64
    %p66 = scmp.ne.s32.totalorder %s52, %s53
    %p67 = scmp.eq.s32.totalorder %s19, 1
    %p68 = por %p66, %p67
    %p70 = scmp.ne.s32.totalorder %s53, %s69
    %p71 = scmp.eq.s32.totalorder %s19, 0
    %p72 = por %p70, %p71
    %s74 = sadd.s32 %s73, 1
    %p77 = scmp.eq.s32.totalorder %s13, 1
    %p78 = scmp.ne.s32.totalorder %s73, %s75
    %p79 = scmp.eq.s32.totalorder %s13, 0
    %p80 = por %p78, %p79
    %p81 = scmp.ne.s32.totalorder %s73, %s75
    %p82 = scmp.eq.s32.totalorder %s18, 1
    %p83 = por %p81, %p82
    %p84 = scmp.ne.s32.totalorder %s75, %s76
    %p85 = scmp.eq.s32.totalorder %s18, 0
    %p86 = por %p84, %p85
    %p87 = scmp.ne.s32.totalorder %s75, %s76
    %p88 = scmp.eq.s32.totalorder %s19, 1
    %p89 = por %p87, %p88
    %p91 = scmp.ne.s32.totalorder %s76, %s90
    %p92 = scmp.eq.s32.totalorder %s19, 0
    %p93 = por %p91, %p92
    %s95 = sadd.s32 %s94, 1
    %p98 = scmp.eq.s32.totalorder %s13, 1
    %p99 = scmp.ne.s32.totalorder %s94, %s96
    %p100 = scmp.eq.s32.totalorder %s13, 0
    %p101 = por %p99, %p100
    %p102 = scmp.ne.s32.totalorder %s94, %s96
    %p103 = scmp.eq.s32.totalorder %s18, 1
    %p104 = por %p102, %p103
    %p105 = scmp.ne.s32.totalorder %s96, %s97
    %p106 = scmp.eq.s32.totalorder %s18, 0
    %p107 = por %p105, %p106
    %p108 = scmp.ne.s32.totalorder %s96, %s97
    %p109 = scmp.eq.s32.totalorder %s19, 1
    %p110 = por %p108, %p109
    %p112 = scmp.ne.s32.totalorder %s97, %s111
    %p113 = scmp.eq.s32.totalorder %s19, 0
    %p114 = por %p112, %p113
    %s116 = sadd.s32 %s115, 1
    %p119 = scmp.eq.s32.totalorder %s13, 1
    %p120 = scmp.ne.s32.totalorder %s115, %s117
    %p121 = scmp.eq.s32.totalorder %s13, 0
    %p122 = por %p120, %p121
    %p123 = scmp.ne.s32.totalorder %s115, %s117
    %p124 = scmp.eq.s32.totalorder %s18, 1
    %p125 = por %p123, %p124
    %p126 = scmp.ne.s32.totalorder %s117, %s118
    %p127 = scmp.eq.s32.totalorder %s18, 0
    %p128 = por %p126, %p127
    %p129 = scmp.ne.s32.totalorder %s117, %s118
    %p130 = scmp.eq.s32.totalorder %s19, 1
    %p131 = por %p129, %p130
    %p133 = scmp.ne.s32.totalorder %s118, %s132
    %p134 = scmp.eq.s32.totalorder %s19, 0
    %p135 = por %p133, %p134
    %s137 = sadd.s32 %s136, 1
    %p140 = scmp.eq.s32.totalorder %s13, 1
    %p141 = scmp.ne.s32.totalorder %s136, %s138
    %p142 = scmp.eq.s32.totalorder %s13, 0
    %p143 = por %p141, %p142
    %p144 = scmp.ne.s32.totalorder %s136, %s138
    %p145 = scmp.eq.s32.totalorder %s18, 1
    %p146 = por %p144, %p145
    %p147 = scmp.ne.s32.totalorder %s138, %s139
    %p148 = scmp.eq.s32.totalorder %s18, 0
    %p149 = por %p147, %p148
    %p150 = scmp.ne.s32.totalorder %s138, %s139
    %p151 = scmp.eq.s32.totalorder %s19, 1
    %p152 = por %p150, %p151
    %p154 = scmp.ne.s32.totalorder %s139, %s153
    %p155 = scmp.eq.s32.totalorder %s19, 0
    %p156 = por %p154, %p155
    %s158 = sadd.s32 %s157, 1
    %p161 = scmp.eq.s32.totalorder %s13, 1
    %p162 = scmp.ne.s32.totalorder %s157, %s159
    %p163 = scmp.eq.s32.totalorder %s13, 0
    %p164 = por %p162, %p163
    %p165 = scmp.ne.s32.totalorder %s157, %s159
    %p166 = scmp.eq.s32.totalorder %s18, 1
    %p167 = por %p165, %p166
    %p168 = scmp.ne.s32.totalorder %s159, %s160
    %p169 = scmp.eq.s32.totalorder %s18, 0
    %p170 = por %p168, %p169
    %p171 = scmp.ne.s32.totalorder %s159, %s160
    %p172 = scmp.eq.s32.totalorder %s19, 1
    %p173 = por %p171, %p172
    %p175 = scmp.ne.s32.totalorder %s160, %s174
    %p176 = scmp.eq.s32.totalorder %s19, 0
    %p177 = por %p175, %p176
    %s178 = ssub.s32 %s13, %s20
    %p179 = scmp.eq.s32.totalorder %s178, 0
    %s181 = sadd.s32 %s180, 1
    %s182 = scalar_select %p179, %s180, %s181
    %p185 = pneg %p179
    %p186 = scmp.eq.s32.totalorder %s13, 1
    %p187 = por %p185, %p186
    %p188 = scmp.ne.s32.totalorder %s180, %s183
    %p189 = scmp.eq.s32.totalorder %s13, 0
    %p190 = por %p188, %p189
    %p191 = scmp.ne.s32.totalorder %s180, %s183
    %p192 = scmp.eq.s32.totalorder %s18, 1
    %p193 = por %p191, %p192
    %p194 = scmp.ne.s32.totalorder %s183, %s184
    %p195 = scmp.eq.s32.totalorder %s18, 0
    %p196 = por %p194, %p195
    %p197 = scmp.ne.s32.totalorder %s183, %s184
    %p198 = scmp.eq.s32.totalorder %s19, 1
    %p199 = por %p197, %p198
    %p201 = scmp.ne.s32.totalorder %s184, %s200
    %p202 = scmp.eq.s32.totalorder %s19, 0
    %p203 = por %p201, %p202
    %p204 = scmp.le.s32.totalorder 1, %s13
    %p205 = scmp.lt.s32.totalorder %s13, 3
    %p206 = pnand %p204, %p205
    %p207 = pneg %p206
    // Predicated region
    $region9: #{_forward.1} parent=5 // pred_check
      _
    $region10: #{_forward.1} parent=5 // pred_check_branch
      %209 = sbr.rel (%p206) target = $region12
    $region11: #{_forward.1} parent=5 // pred_region
      %s210 = ssub.s32 %s13, 1
      // Predicated region
      $region13: #{_forward.1} parent=11 // pred_check
        %p211 = pneg %p86
      $region14: #{_forward.1} parent=11 // pred_check_branch
        %213 = sbr.rel (%p211) target = $region16
      $region15: #{_forward.1} parent=11 // pred_region
        _
      $region16: #{_forward.1} parent=11 // pred_fallthru
        _
      // Predicated region
      $region17: #{_forward.1} parent=11 // pred_check
        %p214 = pneg %p107
      $region18: #{_forward.1} parent=11 // pred_check_branch
        %216 = sbr.rel (%p214) target = $region20
      $region19: #{_forward.1} parent=11 // pred_region
        _
      $region20: #{_forward.1} parent=11 // pred_fallthru
        _
      // Predicated region
      $region21: #{_forward.1} parent=11 // pred_check
        %p217 = pneg %p128
      $region22: #{_forward.1} parent=11 // pred_check_branch
        %219 = sbr.rel (%p217) target = $region24
      $region23: #{_forward.1} parent=11 // pred_region
        _
      $region24: #{_forward.1} parent=11 // pred_fallthru
        _
      // Predicated region
      $region25: #{_forward.1} parent=11 // pred_check
        %p220 = pneg %p149
      $region26: #{_forward.1} parent=11 // pred_check_branch
        %222 = sbr.rel (%p220) target = $region28
      $region27: #{_forward.1} parent=11 // pred_region
        _
      $region28: #{_forward.1} parent=11 // pred_fallthru
        _
      // Predicated region
      $region29: #{_forward.1} parent=11 // pred_check
        %p223 = pneg %p170
      $region30: #{_forward.1} parent=11 // pred_check_branch
        %225 = sbr.rel (%p223) target = $region32
      $region31: #{_forward.1} parent=11 // pred_region
        _
      $region32: #{_forward.1} parent=11 // pred_fallthru
        _
    $region12: #{_forward.1} parent=5 // pred_fallthru
      _
    %p226 = scmp.lt.s32.totalorder %s13, 2
    // Predicated region
    $region33: #{_forward.1} parent=5 // pred_check
      %p227 = pneg %p226
    $region34: #{_forward.1} parent=5 // pred_check_branch
      %229 = sbr.rel (%p227) target = $region36
    $region35: #{_forward.1} parent=5 // pred_region
      // Predicated region
      $region37: #{_forward.1} parent=35 // pred_check
        %p230 = pneg %p33
      $region38: #{_forward.1} parent=35 // pred_check_branch
        %232 = sbr.rel (%p230) target = $region40
      $region39: #{_forward.1} parent=35 // pred_region
        %s233 = smul.u32 16, %s13
        %p234 = scmp.lt.s32.totalorder %s233, 31
        %s235 = scalar_select %p234, %s233, 31
        %s236 = smul.addr %s235, 8
        %s237 = scalar_lea.vmem %s0, %s236
        %s238 = smul.u32 16, %s13
      $region40: #{_forward.1} parent=35 // pred_fallthru
        _
      // Predicated region
      $region41: #{_forward.1} parent=35 // pred_check
        %p239 = pneg %p59
      $region42: #{_forward.1} parent=35 // pred_check_branch
        %241 = sbr.rel (%p239) target = $region44
      $region43: #{_forward.1} parent=35 // pred_region
        %s242 = smul.u32 16, %s13
        %p243 = scmp.lt.s32.totalorder %s242, 31
        %s244 = scalar_select %p243, %s242, 31
        %s245 = smul.addr %s244, 2
        %s246 = smul.addr %s245, 8
        %s247 = scalar_lea.vmem %s1, %s246
        %s248 = smul.u32 16, %s13
      $region44: #{_forward.1} parent=35 // pred_fallthru
        _
    $region36: #{_forward.1} parent=5 // pred_fallthru
      _
    %p249 = scmp.le.s32.totalorder 1, %s13
    %p250 = scmp.lt.s32.totalorder %s13, 3
    %p251 = pnand %p249, %p250
    %p252 = pneg %p251
    // Predicated region
    $region45: #{_forward.1} parent=5 // pred_check
      _
    $region46: #{_forward.1} parent=5 // pred_check_branch
      %254 = sbr.rel (%p251) target = $region48
    $region47: #{_forward.1} parent=5 // pred_region
      %s255 = ssub.s32 %s13, 1
      %s256 = smul.u32 16, %s18
      %p257 = scmp.lt.s32.totalorder %s256, 31
      %s258 = scalar_select %p257, %s256, 31
      %s259 = smul.addr %s258, 8
      %s260 = scalar_lea.vmem %s0, %s259
      %p261 = pneg %p39
      %p262 = pneg %p36
      %s263 = smul.u32 16, %s18
      %p264 = scmp.lt.s32.totalorder %s263, 31
      %s265 = scalar_select %p264, %s263, 31
      %s266 = smul.addr %s265, 2
      %s267 = smul.addr %s266, 8
      %s268 = scalar_lea.vmem %s1, %s267
      %p269 = pneg %p65
      %p270 = pneg %p62
      %p271 = pneg %p86
      %p272 = pneg %p83
      %p273 = pneg %p107
      %p274 = pneg %p104
      %p275 = pneg %p128
      %p276 = pneg %p125
      %p277 = pneg %p149
      %p278 = pneg %p146
      %p279 = pneg %p170
      %p280 = pneg %p167
      %p281 = pneg %p196
      %p282 = pneg %p193
      %s283 = smul.u32 16, %s18
      %p284 = scmp.lt.s32.totalorder %s283, 31
      %s285 = scalar_select %p284, %s283, 31
      %s286 = smul.addr %s285, 8
      %s287 = scalar_lea.vmem %s7, %s286
      %s288 = smul.u32 16, %s18
      %p289 = scmp.lt.s32.totalorder %s288, 31
      %s290 = scalar_select %p289, %s288, 31
      %s291 = smul.addr %s290, 8
      %s292 = scalar_lea.vmem %s0, %s291
      %s293 = smul.u32 16, %s18
      %s294 = smul.u32 16, %s18
      %p295 = scmp.lt.s32.totalorder %s294, 31
      %s296 = scalar_select %p295, %s294, 31
      %s297 = smul.addr %s296, 2
      %s298 = smul.addr %s297, 8
      %s299 = scalar_lea.vmem %s1, %s298
      %s300 = smul.u32 16, %s18
      %s301 = smul.u32 16, %s18
      %p302 = scmp.lt.s32.totalorder %s301, 31
      %s303 = scalar_select %p302, %s301, 31
      %s304 = smul.addr %s303, 8
      %s305 = scalar_lea.vmem %s7, %s304
      %s306 = smul.u32 16, %s18
      %v307 = vld [vmem:[%s292] sm:$0xff]
      %v308 = vld [vmem:[%s292 + $0x8] sm:$0xff]
      %v309 = vld [vmem:[%s292 + $0x10] sm:$0xff]
      %v310 = vld [vmem:[%s292 + $0x18] sm:$0xff]
      %v311 = vld [vmem:[%s292 + $0x20] sm:$0xff]
      %v312 = vld [vmem:[%s292 + $0x28] sm:$0xff]
      %v313 = vld [vmem:[%s292 + $0x30] sm:$0xff]
      %v314 = vld [vmem:[%s292 + $0x38] sm:$0xff]
      %v315 = vld [vmem:[%s292 + $0x40] sm:$0xff]
      %v316 = vld [vmem:[%s292 + $0x48] sm:$0xff]
      %v317 = vld [vmem:[%s292 + $0x50] sm:$0xff]
      %v318 = vld [vmem:[%s292 + $0x58] sm:$0xff]
      %v319 = vld [vmem:[%s292 + $0x60] sm:$0xff]
      %v320 = vld [vmem:[%s292 + $0x68] sm:$0xff]
      %v321 = vld [vmem:[%s292 + $0x70] sm:$0xff]
      %v322 = vld [vmem:[%s292 + $0x78] sm:$0xff]
      %v323 = vld [vmem:[%s299] sm:$0xff]
      %v324 = vld [vmem:[%s299 + $0x8] sm:$0xff]
      %v325 = vld [vmem:[%s299 + $0x10] sm:$0xff]
      %v326 = vld [vmem:[%s299 + $0x18] sm:$0xff]
      %v327 = vld [vmem:[%s299 + $0x20] sm:$0xff]
      %v328 = vld [vmem:[%s299 + $0x28] sm:$0xff]
      %v329 = vld [vmem:[%s299 + $0x30] sm:$0xff]
      %v330 = vld [vmem:[%s299 + $0x38] sm:$0xff]
      %v331 = vld [vmem:[%s299 + $0x40] sm:$0xff]
      %v332 = vld [vmem:[%s299 + $0x48] sm:$0xff]
      %v333 = vld [vmem:[%s299 + $0x50] sm:$0xff]
      %v334 = vld [vmem:[%s299 + $0x58] sm:$0xff]
      %v335 = vld [vmem:[%s299 + $0x60] sm:$0xff]
      %v336 = vld [vmem:[%s299 + $0x68] sm:$0xff]
      %v337 = vld [vmem:[%s299 + $0x70] sm:$0xff]
      %v338 = vld [vmem:[%s299 + $0x78] sm:$0xff]
      %v339 = vld [vmem:[%s299 + $0x80] sm:$0xff]
      %v340 = vld [vmem:[%s299 + $0x88] sm:$0xff]
      %v341 = vld [vmem:[%s299 + $0x90] sm:$0xff]
      %v342 = vld [vmem:[%s299 + $0x98] sm:$0xff]
      %v343 = vld [vmem:[%s299 + $0xa0] sm:$0xff]
      %v344 = vld [vmem:[%s299 + $0xa8] sm:$0xff]
      %v345 = vld [vmem:[%s299 + $0xb0] sm:$0xff]
      %v346 = vld [vmem:[%s299 + $0xb8] sm:$0xff]
      %v347 = vld [vmem:[%s299 + $0xc0] sm:$0xff]
      %v348 = vld [vmem:[%s299 + $0xc8] sm:$0xff]
      %v349 = vld [vmem:[%s299 + $0xd0] sm:$0xff]
      %v350 = vld [vmem:[%s299 + $0xd8] sm:$0xff]
      %v351 = vld [vmem:[%s299 + $0xe0] sm:$0xff]
      %v352 = vld [vmem:[%s299 + $0xe8] sm:$0xff]
      %v353 = vld [vmem:[%s299 + $0xf0] sm:$0xff]
      %v354 = vld [vmem:[%s299 + $0xf8] sm:$0xff]
      %v355 = vld [vmem:[%s2] sm:$0xf]
      %v356 = vld [vmem:[%s2 + $0x4] sm:$0xf]
      %v357 = vld [vmem:[%s2 + $0x8] sm:$0xf]
      %v358 = vld [vmem:[%s2 + $0xc] sm:$0xf]
      %v359 = vunpack.c.l.bf16 %v355
      %v360 = vunpack.c.l.bf16 %v356
      %v361 = vunpack.c.l.bf16 %v357
      %v362 = vunpack.c.l.bf16 %v358
      %v363 = vld [vmem:[%s3] sm:$0xf]
      %v364 = vld [vmem:[%s3 + $0x4] sm:$0xf]
      %v365 = vld [vmem:[%s3 + $0x8] sm:$0xf]
      %v366 = vld [vmem:[%s3 + $0xc] sm:$0xf]
      %v367 = vld [vmem:[%s3 + $0x10] sm:$0xf]
      %v368 = vld [vmem:[%s3 + $0x14] sm:$0xf]
      %v369 = vld [vmem:[%s3 + $0x18] sm:$0xf]
      %v370 = vld [vmem:[%s3 + $0x1c] sm:$0xf]
      %v371 = vld [vmem:[%s3 + $0x20] sm:$0xf]
      %v372 = vld [vmem:[%s3 + $0x24] sm:$0xf]
      %v373 = vld [vmem:[%s3 + $0x28] sm:$0xf]
      %v374 = vld [vmem:[%s3 + $0x2c] sm:$0xf]
      %v375 = vld [vmem:[%s3 + $0x30] sm:$0xf]
      %v376 = vld [vmem:[%s3 + $0x34] sm:$0xf]
      %v377 = vld [vmem:[%s3 + $0x38] sm:$0xf]
      %v378 = vld [vmem:[%s3 + $0x3c] sm:$0xf]
      %v379 = vld [vmem:[%s3 + $0x40] sm:$0xf]
      %v380 = vld [vmem:[%s3 + $0x44] sm:$0xf]
      %v381 = vld [vmem:[%s3 + $0x48] sm:$0xf]
      %v382 = vld [vmem:[%s3 + $0x4c] sm:$0xf]
      %v383 = vld [vmem:[%s3 + $0x50] sm:$0xf]
      %v384 = vld [vmem:[%s3 + $0x54] sm:$0xf]
      %v385 = vld [vmem:[%s3 + $0x58] sm:$0xf]
      %v386 = vld [vmem:[%s3 + $0x5c] sm:$0xf]
      %v387 = vld [vmem:[%s3 + $0x60] sm:$0xf]
      %v388 = vld [vmem:[%s3 + $0x64] sm:$0xf]
      %v389 = vld [vmem:[%s3 + $0x68] sm:$0xf]
      %v390 = vld [vmem:[%s3 + $0x6c] sm:$0xf]
      %v391 = vld [vmem:[%s3 + $0x70] sm:$0xf]
      %v392 = vld [vmem:[%s3 + $0x74] sm:$0xf]
      %v393 = vld [vmem:[%s3 + $0x78] sm:$0xf]
      %v394 = vld [vmem:[%s3 + $0x7c] sm:$0xf]
      %v395 = vunpack.c.l.bf16 %v363
      %v396 = vunpack.c.l.bf16 %v364
      %v397 = vunpack.c.l.bf16 %v365
      %v398 = vunpack.c.l.bf16 %v366
      %v399 = vunpack.c.l.bf16 %v367
      %v400 = vunpack.c.l.bf16 %v368
      %v401 = vunpack.c.l.bf16 %v369
      %v402 = vunpack.c.l.bf16 %v370
      %v403 = vunpack.c.l.bf16 %v371
      %v404 = vunpack.c.l.bf16 %v372
      %v405 = vunpack.c.l.bf16 %v373
      %v406 = vunpack.c.l.bf16 %v374
      %v407 = vunpack.c.l.bf16 %v375
      %v408 = vunpack.c.l.bf16 %v376
      %v409 = vunpack.c.l.bf16 %v377
      %v410 = vunpack.c.l.bf16 %v378
      %v411 = vunpack.c.l.bf16 %v379
      %v412 = vunpack.c.l.bf16 %v380
      %v413 = vunpack.c.l.bf16 %v381
      %v414 = vunpack.c.l.bf16 %v382
      %v415 = vunpack.c.l.bf16 %v383
      %v416 = vunpack.c.l.bf16 %v384
      %v417 = vunpack.c.l.bf16 %v385
      %v418 = vunpack.c.l.bf16 %v386
      %v419 = vunpack.c.l.bf16 %v387
      %v420 = vunpack.c.l.bf16 %v388
      %v421 = vunpack.c.l.bf16 %v389
      %v422 = vunpack.c.l.bf16 %v390
      %v423 = vunpack.c.l.bf16 %v391
      %v424 = vunpack.c.l.bf16 %v392
      %v425 = vunpack.c.l.bf16 %v393
      %v426 = vunpack.c.l.bf16 %v394
      %v427 = vld [vmem:[%s4] sm:$0xf]
      %v428 = vld [vmem:[%s4 + $0x4] sm:$0xf]
      %v429 = vld [vmem:[%s4 + $0x8] sm:$0xf]
      %v430 = vld [vmem:[%s4 + $0xc] sm:$0xf]
      %v431 = vld [vmem:[%s4 + $0x10] sm:$0xf]
      %v432 = vld [vmem:[%s4 + $0x14] sm:$0xf]
      %v433 = vld [vmem:[%s4 + $0x18] sm:$0xf]
      %v434 = vld [vmem:[%s4 + $0x1c] sm:$0xf]
      %v435 = vld [vmem:[%s4 + $0x20] sm:$0xf]
      %v436 = vld [vmem:[%s4 + $0x24] sm:$0xf]
      %v437 = vld [vmem:[%s4 + $0x28] sm:$0xf]
      %v438 = vld [vmem:[%s4 + $0x2c] sm:$0xf]
      %v439 = vld [vmem:[%s4 + $0x30] sm:$0xf]
      %v440 = vld [vmem:[%s4 + $0x34] sm:$0xf]
      %v441 = vld [vmem:[%s4 + $0x38] sm:$0xf]
      %v442 = vld [vmem:[%s4 + $0x3c] sm:$0xf]
      %v443 = vunpack.c.l.bf16 %v427
      %v444 = vunpack.c.l.bf16 %v428
      %v445 = vunpack.c.l.bf16 %v429
      %v446 = vunpack.c.l.bf16 %v430
      %v447 = vunpack.c.l.bf16 %v431
      %v448 = vunpack.c.l.bf16 %v432
      %v449 = vunpack.c.l.bf16 %v433
      %v450 = vunpack.c.l.bf16 %v434
      %v451 = vunpack.c.l.bf16 %v435
      %v452 = vunpack.c.l.bf16 %v436
      %v453 = vunpack.c.l.bf16 %v437
      %v454 = vunpack.c.l.bf16 %v438
      %v455 = vunpack.c.l.bf16 %v439
      %v456 = vunpack.c.l.bf16 %v440
      %v457 = vunpack.c.l.bf16 %v441
      %v458 = vunpack.c.l.bf16 %v442
      %v459 = vld [vmem:[%s5] sm:$0xf]
      %v460 = vld [vmem:[%s5 + $0x4] sm:$0xf]
      %v461 = vld [vmem:[%s5 + $0x8] sm:$0xf]
      %v462 = vld [vmem:[%s5 + $0xc] sm:$0xf]
      %v463 = vld [vmem:[%s5 + $0x10] sm:$0xf]
      %v464 = vld [vmem:[%s5 + $0x14] sm:$0xf]
      %v465 = vld [vmem:[%s5 + $0x18] sm:$0xf]
      %v466 = vld [vmem:[%s5 + $0x1c] sm:$0xf]
      %v467 = vld [vmem:[%s5 + $0x20] sm:$0xf]
      %v468 = vld [vmem:[%s5 + $0x24] sm:$0xf]
      %v469 = vld [vmem:[%s5 + $0x28] sm:$0xf]
      %v470 = vld [vmem:[%s5 + $0x2c] sm:$0xf]
      %v471 = vld [vmem:[%s5 + $0x30] sm:$0xf]
      %v472 = vld [vmem:[%s5 + $0x34] sm:$0xf]
      %v473 = vld [vmem:[%s5 + $0x38] sm:$0xf]
      %v474 = vld [vmem:[%s5 + $0x3c] sm:$0xf]
      %v475 = vunpack.c.l.bf16 %v459
      %v476 = vunpack.c.l.bf16 %v460
      %v477 = vunpack.c.l.bf16 %v461
      %v478 = vunpack.c.l.bf16 %v462
      %v479 = vunpack.c.l.bf16 %v463
      %v480 = vunpack.c.l.bf16 %v464
      %v481 = vunpack.c.l.bf16 %v465
      %v482 = vunpack.c.l.bf16 %v466
      %v483 = vunpack.c.l.bf16 %v467
      %v484 = vunpack.c.l.bf16 %v468
      %v485 = vunpack.c.l.bf16 %v469
      %v486 = vunpack.c.l.bf16 %v470
      %v487 = vunpack.c.l.bf16 %v471
      %v488 = vunpack.c.l.bf16 %v472
      %v489 = vunpack.c.l.bf16 %v473
      %v490 = vunpack.c.l.bf16 %v474
      %v491 = vld [vmem:[%s6] sm:$0xff]
      %492 = vmatpush.msra.mxu0 %v410
      %493 = vmatpush.msra.mxu0 %v409
      %494 = vmatpush.msra.mxu0 %v408
      %495 = vmatpush.msra.mxu0 %v407
      %496 = vmatpush.msra.mxu0 %v406
      %497 = vmatpush.msra.mxu0 %v405
      %498 = vmatpush.msra.mxu0 %v404
      %499 = vmatpush.msra.mxu0 %v403
      %500 = vmatpush.msra.mxu0 %v402
      %501 = vmatpush.msra.mxu0 %v401
      %502 = vmatpush.msra.mxu0 %v400
      %503 = vmatpush.msra.mxu0 %v399
      %504 = vmatpush.msra.mxu0 %v398
      %505 = vmatpush.msra.mxu0 %v397
      %506 = vmatpush.msra.mxu0 %v396
      %507 = vmatpush.msra.mxu0 %v395
      %508 = vmatmul.f32.gmra.mxu0 %v323
      %v509 = vpop.f32.mrf.mxu0
      %v510 = vadd.f32 0.0, %v509
      %511 = vmatmul.f32.gmra.mxu0 %v325
      %v512 = vpop.f32.mrf.mxu0
      %v513 = vadd.f32 0.0, %v512
      %514 = vmatmul.f32.gmra.mxu0 %v327
      %v515 = vpop.f32.mrf.mxu0
      %v516 = vadd.f32 0.0, %v515
      %517 = vmatmul.f32.gmra.mxu0 %v329
      %v518 = vpop.f32.mrf.mxu0
      %v519 = vadd.f32 0.0, %v518
      %520 = vmatmul.f32.gmra.mxu0 %v331
      %v521 = vpop.f32.mrf.mxu0
      %v522 = vadd.f32 0.0, %v521
      %523 = vmatmul.f32.gmra.mxu0 %v333
      %v524 = vpop.f32.mrf.mxu0
      %v525 = vadd.f32 0.0, %v524
      %526 = vmatmul.f32.gmra.mxu0 %v335
      %v527 = vpop.f32.mrf.mxu0
      %v528 = vadd.f32 0.0, %v527
      %529 = vmatmul.f32.gmra.mxu0 %v337
      %v530 = vpop.f32.mrf.mxu0
      %v531 = vadd.f32 0.0, %v530
      %532 = vmatmul.f32.gmra.mxu0 %v339
      %v533 = vpop.f32.mrf.mxu0
      %v534 = vadd.f32 0.0, %v533
      %535 = vmatmul.f32.gmra.mxu0 %v341
      %v536 = vpop.f32.mrf.mxu0
      %v537 = vadd.f32 0.0, %v536
      %538 = vmatmul.f32.gmra.mxu0 %v343
      %v539 = vpop.f32.mrf.mxu0
      %v540 = vadd.f32 0.0, %v539
      %541 = vmatmul.f32.gmra.mxu0 %v345
      %v542 = vpop.f32.mrf.mxu0
      %v543 = vadd.f32 0.0, %v542
      %544 = vmatmul.f32.gmra.mxu0 %v347
      %v545 = vpop.f32.mrf.mxu0
      %v546 = vadd.f32 0.0, %v545
      %547 = vmatmul.f32.gmra.mxu0 %v349
      %v548 = vpop.f32.mrf.mxu0
      %v549 = vadd.f32 0.0, %v548
      %550 = vmatmul.f32.gmra.mxu0 %v351
      %v551 = vpop.f32.mrf.mxu0
      %v552 = vadd.f32 0.0, %v551
      %553 = vmatmul.f32.gmra.mxu0 %v353
      %v554 = vpop.f32.mrf.mxu0
      %v555 = vadd.f32 0.0, %v554
      %556 = vdwg.mxu0
      %557 = vmatpush.msra.mxu0 %v426
      %558 = vmatpush.msra.mxu0 %v425
      %559 = vmatpush.msra.mxu0 %v424
      %560 = vmatpush.msra.mxu0 %v423
      %561 = vmatpush.msra.mxu0 %v422
      %562 = vmatpush.msra.mxu0 %v421
      %563 = vmatpush.msra.mxu0 %v420
      %564 = vmatpush.msra.mxu0 %v419
      %565 = vmatpush.msra.mxu0 %v418
      %566 = vmatpush.msra.mxu0 %v417
      %567 = vmatpush.msra.mxu0 %v416
      %568 = vmatpush.msra.mxu0 %v415
      %569 = vmatpush.msra.mxu0 %v414
      %570 = vmatpush.msra.mxu0 %v413
      %571 = vmatpush.msra.mxu0 %v412
      %572 = vmatpush.msra.mxu0 %v411
      %573 = vmatmul.f32.gmra.mxu0 %v324
      %v574 = vpop.f32.mrf.mxu0
      %v575 = vadd.f32 %v510, %v574
      %576 = vmatmul.f32.gmra.mxu0 %v326
      %v577 = vpop.f32.mrf.mxu0
      %v578 = vadd.f32 %v513, %v577
      %579 = vmatmul.f32.gmra.mxu0 %v328
      %v580 = vpop.f32.mrf.mxu0
      %v581 = vadd.f32 %v516, %v580
      %582 = vmatmul.f32.gmra.mxu0 %v330
      %v583 = vpop.f32.mrf.mxu0
      %v584 = vadd.f32 %v519, %v583
      %585 = vmatmul.f32.gmra.mxu0 %v332
      %v586 = vpop.f32.mrf.mxu0
      %v587 = vadd.f32 %v522, %v586
      %588 = vmatmul.f32.gmra.mxu0 %v334
      %v589 = vpop.f32.mrf.mxu0
      %v590 = vadd.f32 %v525, %v589
      %591 = vmatmul.f32.gmra.mxu0 %v336
      %v592 = vpop.f32.mrf.mxu0
      %v593 = vadd.f32 %v528, %v592
      %594 = vmatmul.f32.gmra.mxu0 %v338
      %v595 = vpop.f32.mrf.mxu0
      %v596 = vadd.f32 %v531, %v595
      %597 = vmatmul.f32.gmra.mxu0 %v340
      %v598 = vpop.f32.mrf.mxu0
      %v599 = vadd.f32 %v534, %v598
      %600 = vmatmul.f32.gmra.mxu0 %v342
      %v601 = vpop.f32.mrf.mxu0
      %v602 = vadd.f32 %v537, %v601
      %603 = vmatmul.f32.gmra.mxu0 %v344
      %v604 = vpop.f32.mrf.mxu0
      %v605 = vadd.f32 %v540, %v604
      %606 = vmatmul.f32.gmra.mxu0 %v346
      %v607 = vpop.f32.mrf.mxu0
      %v608 = vadd.f32 %v543, %v607
      %609 = vmatmul.f32.gmra.mxu0 %v348
      %v610 = vpop.f32.mrf.mxu0
      %v611 = vadd.f32 %v546, %v610
      %612 = vmatmul.f32.gmra.mxu0 %v350
      %v613 = vpop.f32.mrf.mxu0
      %v614 = vadd.f32 %v549, %v613
      %615 = vmatmul.f32.gmra.mxu0 %v352
      %v616 = vpop.f32.mrf.mxu0
      %v617 = vadd.f32 %v552, %v616
      %618 = vmatmul.f32.gmra.mxu0 %v354
      %v619 = vpop.f32.mrf.mxu0
      %v620 = vadd.f32 %v555, %v619
      %621 = vdwg.mxu0
      %vm622 = vcmask 261120
      %v624 = vsel %vm622, %v307, 0
      %v627 = vsel %vm622, %v308, 0
      %v630 = vsel %vm622, %v309, 0
      %v633 = vsel %vm622, %v310, 0
      %v636 = vsel %vm622, %v311, 0
      %v639 = vsel %vm622, %v312, 0
      %v642 = vsel %vm622, %v313, 0
      %v645 = vsel %vm622, %v314, 0
      %v648 = vsel %vm622, %v315, 0
      %v651 = vsel %vm622, %v316, 0
      %v654 = vsel %vm622, %v317, 0
      %v657 = vsel %vm622, %v318, 0
      %v660 = vsel %vm622, %v319, 0
      %v663 = vsel %vm622, %v320, 0
      %v666 = vsel %vm622, %v321, 0
      %v669 = vsel %vm622, %v322, 0
      %671 = vmatpush.msra.mxu0 0.0
      %672 = vmatpush.msra.mxu0 0.0
      %673 = vmatpush.msra.mxu0 0.0
      %674 = vmatpush.msra.mxu0 0.0
      %675 = vmatpush.msra.mxu0 0.0
      %676 = vmatpush.msra.mxu0 0.0
      %677 = vmatpush.msra.mxu0 0.0
      %678 = vmatpush.msra.mxu0 0.0
      %679 = vmatpush.msra.mxu0 0.0
      %680 = vmatpush.msra.mxu0 0.0
      %681 = vmatpush.msra.mxu0 0.0
      %682 = vmatpush.msra.mxu0 0.0
      %683 = vmatpush.msra.mxu0 %v362
      %684 = vmatpush.msra.mxu0 %v361
      %685 = vmatpush.msra.mxu0 %v360
      %686 = vmatpush.msra.mxu0 %v359
      %687 = vmatmul.f32.gmra.mxu0 %v624
      %v688 = vpop.f32.mrf.mxu0
      %v689 = vadd.f32 %v575, %v688
      %690 = vmatmul.f32.gmra.mxu0 %v627
      %v691 = vpop.f32.mrf.mxu0
      %v692 = vadd.f32 %v578, %v691
      %693 = vmatmul.f32.gmra.mxu0 %v630
      %v694 = vpop.f32.mrf.mxu0
      %v695 = vadd.f32 %v581, %v694
      %696 = vmatmul.f32.gmra.mxu0 %v633
      %v697 = vpop.f32.mrf.mxu0
      %v698 = vadd.f32 %v584, %v697
      %699 = vmatmul.f32.gmra.mxu0 %v636
      %v700 = vpop.f32.mrf.mxu0
      %v701 = vadd.f32 %v587, %v700
      %702 = vmatmul.f32.gmra.mxu0 %v639
      %v703 = vpop.f32.mrf.mxu0
      %v704 = vadd.f32 %v590, %v703
      %705 = vmatmul.f32.gmra.mxu0 %v642
      %v706 = vpop.f32.mrf.mxu0
      %v707 = vadd.f32 %v593, %v706
      %708 = vmatmul.f32.gmra.mxu0 %v645
      %v709 = vpop.f32.mrf.mxu0
      %v710 = vadd.f32 %v596, %v709
      %711 = vmatmul.f32.gmra.mxu0 %v648
      %v712 = vpop.f32.mrf.mxu0
      %v713 = vadd.f32 %v599, %v712
      %714 = vmatmul.f32.gmra.mxu0 %v651
      %v715 = vpop.f32.mrf.mxu0
      %v716 = vadd.f32 %v602, %v715
      %717 = vmatmul.f32.gmra.mxu0 %v654
      %v718 = vpop.f32.mrf.mxu0
      %v719 = vadd.f32 %v605, %v718
      %720 = vmatmul.f32.gmra.mxu0 %v657
      %v721 = vpop.f32.mrf.mxu0
      %v722 = vadd.f32 %v608, %v721
      %723 = vmatmul.f32.gmra.mxu0 %v660
      %v724 = vpop.f32.mrf.mxu0
      %v725 = vadd.f32 %v611, %v724
      %726 = vmatmul.f32.gmra.mxu0 %v663
      %v727 = vpop.f32.mrf.mxu0
      %v728 = vadd.f32 %v614, %v727
      %729 = vmatmul.f32.gmra.mxu0 %v666
      %v730 = vpop.f32.mrf.mxu0
      %v731 = vadd.f32 %v617, %v730
      %732 = vmatmul.f32.gmra.mxu0 %v669
      %v733 = vpop.f32.mrf.mxu0
      %v734 = vadd.f32 %v620, %v733
      %735 = vdwg.mxu0
      %v736 = vperm.slane %v491, 0
      %v737 = vadd.f32 %v689, %v736
      %v738 = vadd.f32 %v692, %v736
      %v739 = vadd.f32 %v695, %v736
      %v740 = vadd.f32 %v698, %v736
      %v741 = vadd.f32 %v701, %v736
      %v742 = vadd.f32 %v704, %v736
      %v743 = vadd.f32 %v707, %v736
      %v744 = vadd.f32 %v710, %v736
      %v745 = vadd.f32 %v713, %v736
      %v746 = vadd.f32 %v716, %v736
      %v747 = vadd.f32 %v719, %v736
      %v748 = vadd.f32 %v722, %v736
      %v749 = vadd.f32 %v725, %v736
      %v750 = vadd.f32 %v728, %v736
      %v751 = vadd.f32 %v731, %v736
      %v752 = vadd.f32 %v734, %v736
      %v753 = vmax.f32 %v737, 0.0
      %v754 = vmax.f32 %v738, 0.0
      %v755 = vmax.f32 %v739, 0.0
      %v756 = vmax.f32 %v740, 0.0
      %v757 = vmax.f32 %v741, 0.0
      %v758 = vmax.f32 %v742, 0.0
      %v759 = vmax.f32 %v743, 0.0
      %v760 = vmax.f32 %v744, 0.0
      %v761 = vmax.f32 %v745, 0.0
      %v762 = vmax.f32 %v746, 0.0
      %v763 = vmax.f32 %v747, 0.0
      %v764 = vmax.f32 %v748, 0.0
      %v765 = vmax.f32 %v749, 0.0
      %v766 = vmax.f32 %v750, 0.0
      %v767 = vmax.f32 %v751, 0.0
      %v768 = vmax.f32 %v752, 0.0
      %v769 = vperm.slane %v491, 1
      %770 = vmatpush.msra.mxu0 %v458
      %771 = vmatpush.msra.mxu0 %v457
      %772 = vmatpush.msra.mxu0 %v456
      %773 = vmatpush.msra.mxu0 %v455
      %774 = vmatpush.msra.mxu0 %v454
      %775 = vmatpush.msra.mxu0 %v453
      %776 = vmatpush.msra.mxu0 %v452
      %777 = vmatpush.msra.mxu0 %v451
      %778 = vmatpush.msra.mxu0 %v450
      %779 = vmatpush.msra.mxu0 %v449
      %780 = vmatpush.msra.mxu0 %v448
      %781 = vmatpush.msra.mxu0 %v447
      %782 = vmatpush.msra.mxu0 %v446
      %783 = vmatpush.msra.mxu0 %v445
      %784 = vmatpush.msra.mxu0 %v444
      %785 = vmatpush.msra.mxu0 %v443
      %786 = vmatmul.f32.gmra.mxu0 %v753
      %v787 = vpop.f32.mrf.mxu0
      %v788 = vadd.f32 %v769, %v787
      %789 = vmatmul.f32.gmra.mxu0 %v754
      %v790 = vpop.f32.mrf.mxu0
      %v791 = vadd.f32 %v769, %v790
      %792 = vmatmul.f32.gmra.mxu0 %v755
      %v793 = vpop.f32.mrf.mxu0
      %v794 = vadd.f32 %v769, %v793
      %795 = vmatmul.f32.gmra.mxu0 %v756
      %v796 = vpop.f32.mrf.mxu0
      %v797 = vadd.f32 %v769, %v796
      %798 = vmatmul.f32.gmra.mxu0 %v757
      %v799 = vpop.f32.mrf.mxu0
      %v800 = vadd.f32 %v769, %v799
      %801 = vmatmul.f32.gmra.mxu0 %v758
      %v802 = vpop.f32.mrf.mxu0
      %v803 = vadd.f32 %v769, %v802
      %804 = vmatmul.f32.gmra.mxu0 %v759
      %v805 = vpop.f32.mrf.mxu0
      %v806 = vadd.f32 %v769, %v805
      %807 = vmatmul.f32.gmra.mxu0 %v760
      %v808 = vpop.f32.mrf.mxu0
      %v809 = vadd.f32 %v769, %v808
      %810 = vmatmul.f32.gmra.mxu0 %v761
      %v811 = vpop.f32.mrf.mxu0
      %v812 = vadd.f32 %v769, %v811
      %813 = vmatmul.f32.gmra.mxu0 %v762
      %v814 = vpop.f32.mrf.mxu0
      %v815 = vadd.f32 %v769, %v814
      %816 = vmatmul.f32.gmra.mxu0 %v763
      %v817 = vpop.f32.mrf.mxu0
      %v818 = vadd.f32 %v769, %v817
      %819 = vmatmul.f32.gmra.mxu0 %v764
      %v820 = vpop.f32.mrf.mxu0
      %v821 = vadd.f32 %v769, %v820
      %822 = vmatmul.f32.gmra.mxu0 %v765
      %v823 = vpop.f32.mrf.mxu0
      %v824 = vadd.f32 %v769, %v823
      %825 = vmatmul.f32.gmra.mxu0 %v766
      %v826 = vpop.f32.mrf.mxu0
      %v827 = vadd.f32 %v769, %v826
      %828 = vmatmul.f32.gmra.mxu0 %v767
      %v829 = vpop.f32.mrf.mxu0
      %v830 = vadd.f32 %v769, %v829
      %831 = vmatmul.f32.gmra.mxu0 %v768
      %v832 = vpop.f32.mrf.mxu0
      %v833 = vadd.f32 %v769, %v832
      %834 = vdwg.mxu0
      %v835 = vmax.f32 %v788, 0.0
      %v836 = vmax.f32 %v791, 0.0
      %v837 = vmax.f32 %v794, 0.0
      %v838 = vmax.f32 %v797, 0.0
      %v839 = vmax.f32 %v800, 0.0
      %v840 = vmax.f32 %v803, 0.0
      %v841 = vmax.f32 %v806, 0.0
      %v842 = vmax.f32 %v809, 0.0
      %v843 = vmax.f32 %v812, 0.0
      %v844 = vmax.f32 %v815, 0.0
      %v845 = vmax.f32 %v818, 0.0
      %v846 = vmax.f32 %v821, 0.0
      %v847 = vmax.f32 %v824, 0.0
      %v848 = vmax.f32 %v827, 0.0
      %v849 = vmax.f32 %v830, 0.0
      %v850 = vmax.f32 %v833, 0.0
      %v851 = vlaneseq
      %v852 = vand.u32 %v851, 127
      %vm853 = vcmp.lt.s32.totalorder %v852, 32
      %v854 = vsel %vm853, %v753, %v835
      %v855 = vsel %vm853, %v754, %v836
      %v856 = vsel %vm853, %v755, %v837
      %v857 = vsel %vm853, %v756, %v838
      %v858 = vsel %vm853, %v757, %v839
      %v859 = vsel %vm853, %v758, %v840
      %v860 = vsel %vm853, %v759, %v841
      %v861 = vsel %vm853, %v760, %v842
      %v862 = vsel %vm853, %v761, %v843
      %v863 = vsel %vm853, %v762, %v844
      %v864 = vsel %vm853, %v763, %v845
      %v865 = vsel %vm853, %v764, %v846
      %v866 = vsel %vm853, %v765, %v847
      %v867 = vsel %vm853, %v766, %v848
      %v868 = vsel %vm853, %v767, %v849
      %v869 = vsel %vm853, %v768, %v850
      %v870 = vperm.slane %v491, 2
      %871 = vmatpush.msra.mxu0 %v490
      %872 = vmatpush.msra.mxu0 %v489
      %873 = vmatpush.msra.mxu0 %v488
      %874 = vmatpush.msra.mxu0 %v487
      %875 = vmatpush.msra.mxu0 %v486
      %876 = vmatpush.msra.mxu0 %v485
      %877 = vmatpush.msra.mxu0 %v484
      %878 = vmatpush.msra.mxu0 %v483
      %879 = vmatpush.msra.mxu0 %v482
      %880 = vmatpush.msra.mxu0 %v481
      %881 = vmatpush.msra.mxu0 %v480
      %882 = vmatpush.msra.mxu0 %v479
      %883 = vmatpush.msra.mxu0 %v478
      %884 = vmatpush.msra.mxu0 %v477
      %885 = vmatpush.msra.mxu0 %v476
      %886 = vmatpush.msra.mxu0 %v475
      %887 = vmatmul.f32.gmra.mxu0 %v854
      %v888 = vpop.f32.mrf.mxu0
      %v889 = vadd.f32 %v870, %v888
      %890 = vmatmul.f32.gmra.mxu0 %v855
      %v891 = vpop.f32.mrf.mxu0
      %v892 = vadd.f32 %v870, %v891
      %893 = vmatmul.f32.gmra.mxu0 %v856
      %v894 = vpop.f32.mrf.mxu0
      %v895 = vadd.f32 %v870, %v894
      %896 = vmatmul.f32.gmra.mxu0 %v857
      %v897 = vpop.f32.mrf.mxu0
      %v898 = vadd.f32 %v870, %v897
      %899 = vmatmul.f32.gmra.mxu0 %v858
      %v900 = vpop.f32.mrf.mxu0
      %v901 = vadd.f32 %v870, %v900
      %902 = vmatmul.f32.gmra.mxu0 %v859
      %v903 = vpop.f32.mrf.mxu0
      %v904 = vadd.f32 %v870, %v903
      %905 = vmatmul.f32.gmra.mxu0 %v860
      %v906 = vpop.f32.mrf.mxu0
      %v907 = vadd.f32 %v870, %v906
      %908 = vmatmul.f32.gmra.mxu0 %v861
      %v909 = vpop.f32.mrf.mxu0
      %v910 = vadd.f32 %v870, %v909
      %911 = vmatmul.f32.gmra.mxu0 %v862
      %v912 = vpop.f32.mrf.mxu0
      %v913 = vadd.f32 %v870, %v912
      %914 = vmatmul.f32.gmra.mxu0 %v863
      %v915 = vpop.f32.mrf.mxu0
      %v916 = vadd.f32 %v870, %v915
      %917 = vmatmul.f32.gmra.mxu0 %v864
      %v918 = vpop.f32.mrf.mxu0
      %v919 = vadd.f32 %v870, %v918
      %920 = vmatmul.f32.gmra.mxu0 %v865
      %v921 = vpop.f32.mrf.mxu0
      %v922 = vadd.f32 %v870, %v921
      %923 = vmatmul.f32.gmra.mxu0 %v866
      %v924 = vpop.f32.mrf.mxu0
      %v925 = vadd.f32 %v870, %v924
      %926 = vmatmul.f32.gmra.mxu0 %v867
      %v927 = vpop.f32.mrf.mxu0
      %v928 = vadd.f32 %v870, %v927
      %929 = vmatmul.f32.gmra.mxu0 %v868
      %v930 = vpop.f32.mrf.mxu0
      %v931 = vadd.f32 %v870, %v930
      %932 = vmatmul.f32.gmra.mxu0 %v869
      %v933 = vpop.f32.mrf.mxu0
      %v934 = vadd.f32 %v870, %v933
      %935 = vdwg.mxu0
      %vm936 = vcmp.lt.s32.totalorder %v852, 16
      %vm937 = vcmp.ge.s32.totalorder %v852, 16
      %vm938 = vmand %vm937, %vm853
      %vm939 = vcmp.ge.s32.totalorder %v852, 32
      %vm940 = vcmp.lt.s32.totalorder %v852, 48
      %vm941 = vmand %vm939, %vm940
      %v942 = vsel %vm936, %v889, -1e+30
      %v943 = vsel %vm936, %v892, -1e+30
      %v944 = vsel %vm936, %v895, -1e+30
      %v945 = vsel %vm936, %v898, -1e+30
      %v946 = vsel %vm936, %v901, -1e+30
      %v947 = vsel %vm936, %v904, -1e+30
      %v948 = vsel %vm936, %v907, -1e+30
      %v949 = vsel %vm936, %v910, -1e+30
      %v950 = vsel %vm936, %v913, -1e+30
      %v951 = vsel %vm936, %v916, -1e+30
      %v952 = vsel %vm936, %v919, -1e+30
      %v953 = vsel %vm936, %v922, -1e+30
      %v954 = vsel %vm936, %v925, -1e+30
      %v955 = vsel %vm936, %v928, -1e+30
      %v956 = vsel %vm936, %v931, -1e+30
      %v957 = vsel %vm936, %v934, -1e+30
      %958 = vmax.xlane.f32.xlu0 %v942
      %v959 = vpop.xlane.xlu0 %958
      %960 = vmax.xlane.f32.xlu0 %v943
      %v961 = vpop.xlane.xlu0 %960
      %962 = vmax.xlane.f32.xlu0 %v944
      %v963 = vpop.xlane.xlu0 %962
      %964 = vmax.xlane.f32.xlu0 %v945
      %v965 = vpop.xlane.xlu0 %964
      %966 = vmax.xlane.f32.xlu0 %v946
      %v967 = vpop.xlane.xlu0 %966
      %968 = vmax.xlane.f32.xlu0 %v947
      %v969 = vpop.xlane.xlu0 %968
      %970 = vmax.xlane.f32.xlu0 %v948
      %v971 = vpop.xlane.xlu0 %970
      %972 = vmax.xlane.f32.xlu0 %v949
      %v973 = vpop.xlane.xlu0 %972
      %974 = vmax.xlane.f32.xlu0 %v950
      %v975 = vpop.xlane.xlu0 %974
      %976 = vmax.xlane.f32.xlu0 %v951
      %v977 = vpop.xlane.xlu0 %976
      %978 = vmax.xlane.f32.xlu0 %v952
      %v979 = vpop.xlane.xlu0 %978
      %980 = vmax.xlane.f32.xlu0 %v953
      %v981 = vpop.xlane.xlu0 %980
      %982 = vmax.xlane.f32.xlu0 %v954
      %v983 = vpop.xlane.xlu0 %982
      %984 = vmax.xlane.f32.xlu0 %v955
      %v985 = vpop.xlane.xlu0 %984
      %986 = vmax.xlane.f32.xlu0 %v956
      %v987 = vpop.xlane.xlu0 %986
      %988 = vmax.xlane.f32.xlu0 %v957
      %v989 = vpop.xlane.xlu0 %988
      %v990 = vsel %vm938, %v889, -1e+30
      %v991 = vsel %vm938, %v892, -1e+30
      %v992 = vsel %vm938, %v895, -1e+30
      %v993 = vsel %vm938, %v898, -1e+30
      %v994 = vsel %vm938, %v901, -1e+30
      %v995 = vsel %vm938, %v904, -1e+30
      %v996 = vsel %vm938, %v907, -1e+30
      %v997 = vsel %vm938, %v910, -1e+30
      %v998 = vsel %vm938, %v913, -1e+30
      %v999 = vsel %vm938, %v916, -1e+30
      %v1000 = vsel %vm938, %v919, -1e+30
      %v1001 = vsel %vm938, %v922, -1e+30
      %v1002 = vsel %vm938, %v925, -1e+30
      %v1003 = vsel %vm938, %v928, -1e+30
      %v1004 = vsel %vm938, %v931, -1e+30
      %v1005 = vsel %vm938, %v934, -1e+30
      %1006 = vmax.xlane.f32.xlu0 %v990
      %v1007 = vpop.xlane.xlu0 %1006
      %1008 = vmax.xlane.f32.xlu0 %v991
      %v1009 = vpop.xlane.xlu0 %1008
      %1010 = vmax.xlane.f32.xlu0 %v992
      %v1011 = vpop.xlane.xlu0 %1010
      %1012 = vmax.xlane.f32.xlu0 %v993
      %v1013 = vpop.xlane.xlu0 %1012
      %1014 = vmax.xlane.f32.xlu0 %v994
      %v1015 = vpop.xlane.xlu0 %1014
      %1016 = vmax.xlane.f32.xlu0 %v995
      %v1017 = vpop.xlane.xlu0 %1016
      %1018 = vmax.xlane.f32.xlu0 %v996
      %v1019 = vpop.xlane.xlu0 %1018
      %1020 = vmax.xlane.f32.xlu0 %v997
      %v1021 = vpop.xlane.xlu0 %1020
      %1022 = vmax.xlane.f32.xlu0 %v998
      %v1023 = vpop.xlane.xlu0 %1022
      %1024 = vmax.xlane.f32.xlu0 %v999
      %v1025 = vpop.xlane.xlu0 %1024
      %1026 = vmax.xlane.f32.xlu0 %v1000
      %v1027 = vpop.xlane.xlu0 %1026
      %1028 = vmax.xlane.f32.xlu0 %v1001
      %v1029 = vpop.xlane.xlu0 %1028
      %1030 = vmax.xlane.f32.xlu0 %v1002
      %v1031 = vpop.xlane.xlu0 %1030
      %1032 = vmax.xlane.f32.xlu0 %v1003
      %v1033 = vpop.xlane.xlu0 %1032
      %1034 = vmax.xlane.f32.xlu0 %v1004
      %v1035 = vpop.xlane.xlu0 %1034
      %1036 = vmax.xlane.f32.xlu0 %v1005
      %v1037 = vpop.xlane.xlu0 %1036
      %v1038 = vsel %vm941, %v889, -1e+30
      %v1039 = vsel %vm941, %v892, -1e+30
      %v1040 = vsel %vm941, %v895, -1e+30
      %v1041 = vsel %vm941, %v898, -1e+30
      %v1042 = vsel %vm941, %v901, -1e+30
      %v1043 = vsel %vm941, %v904, -1e+30
      %v1044 = vsel %vm941, %v907, -1e+30
      %v1045 = vsel %vm941, %v910, -1e+30
      %v1046 = vsel %vm941, %v913, -1e+30
      %v1047 = vsel %vm941, %v916, -1e+30
      %v1048 = vsel %vm941, %v919, -1e+30
      %v1049 = vsel %vm941, %v922, -1e+30
      %v1050 = vsel %vm941, %v925, -1e+30
      %v1051 = vsel %vm941, %v928, -1e+30
      %v1052 = vsel %vm941, %v931, -1e+30
      %v1053 = vsel %vm941, %v934, -1e+30
      %1054 = vmax.xlane.f32.xlu0 %v1038
      %v1055 = vpop.xlane.xlu0 %1054
      %1056 = vmax.xlane.f32.xlu0 %v1039
      %v1057 = vpop.xlane.xlu0 %1056
      %1058 = vmax.xlane.f32.xlu0 %v1040
      %v1059 = vpop.xlane.xlu0 %1058
      %1060 = vmax.xlane.f32.xlu0 %v1041
      %v1061 = vpop.xlane.xlu0 %1060
      %1062 = vmax.xlane.f32.xlu0 %v1042
      %v1063 = vpop.xlane.xlu0 %1062
      %1064 = vmax.xlane.f32.xlu0 %v1043
      %v1065 = vpop.xlane.xlu0 %1064
      %1066 = vmax.xlane.f32.xlu0 %v1044
      %v1067 = vpop.xlane.xlu0 %1066
      %1068 = vmax.xlane.f32.xlu0 %v1045
      %v1069 = vpop.xlane.xlu0 %1068
      %1070 = vmax.xlane.f32.xlu0 %v1046
      %v1071 = vpop.xlane.xlu0 %1070
      %1072 = vmax.xlane.f32.xlu0 %v1047
      %v1073 = vpop.xlane.xlu0 %1072
      %1074 = vmax.xlane.f32.xlu0 %v1048
      %v1075 = vpop.xlane.xlu0 %1074
      %1076 = vmax.xlane.f32.xlu0 %v1049
      %v1077 = vpop.xlane.xlu0 %1076
      %1078 = vmax.xlane.f32.xlu0 %v1050
      %v1079 = vpop.xlane.xlu0 %1078
      %1080 = vmax.xlane.f32.xlu0 %v1051
      %v1081 = vpop.xlane.xlu0 %1080
      %1082 = vmax.xlane.f32.xlu0 %v1052
      %v1083 = vpop.xlane.xlu0 %1082
      %1084 = vmax.xlane.f32.xlu0 %v1053
      %v1085 = vpop.xlane.xlu0 %1084
      %v1086 = vsel %vm938, %v1007, %v1055
      %v1087 = vsel %vm938, %v1009, %v1057
      %v1088 = vsel %vm938, %v1011, %v1059
      %v1089 = vsel %vm938, %v1013, %v1061
      %v1090 = vsel %vm938, %v1015, %v1063
      %v1091 = vsel %vm938, %v1017, %v1065
      %v1092 = vsel %vm938, %v1019, %v1067
      %v1093 = vsel %vm938, %v1021, %v1069
      %v1094 = vsel %vm938, %v1023, %v1071
      %v1095 = vsel %vm938, %v1025, %v1073
      %v1096 = vsel %vm938, %v1027, %v1075
      %v1097 = vsel %vm938, %v1029, %v1077
      %v1098 = vsel %vm938, %v1031, %v1079
      %v1099 = vsel %vm938, %v1033, %v1081
      %v1100 = vsel %vm938, %v1035, %v1083
      %v1101 = vsel %vm938, %v1037, %v1085
      %v1102 = vsel %vm936, %v959, %v1086
      %v1103 = vsel %vm936, %v961, %v1087
      %v1104 = vsel %vm936, %v963, %v1088
      %v1105 = vsel %vm936, %v965, %v1089
      %v1106 = vsel %vm936, %v967, %v1090
      %v1107 = vsel %vm936, %v969, %v1091
      %v1108 = vsel %vm936, %v971, %v1092
      %v1109 = vsel %vm936, %v973, %v1093
      %v1110 = vsel %vm936, %v975, %v1094
      %v1111 = vsel %vm936, %v977, %v1095
      %v1112 = vsel %vm936, %v979, %v1096
      %v1113 = vsel %vm936, %v981, %v1097
      %v1114 = vsel %vm936, %v983, %v1098
      %v1115 = vsel %vm936, %v985, %v1099
      %v1116 = vsel %vm936, %v987, %v1100
      %v1117 = vsel %vm936, %v989, %v1101
      %v1118 = vsub.f32 %v889, %v1102
      %v1119 = vsub.f32 %v892, %v1103
      %v1120 = vsub.f32 %v895, %v1104
      %v1121 = vsub.f32 %v898, %v1105
      %v1122 = vsub.f32 %v901, %v1106
      %v1123 = vsub.f32 %v904, %v1107
      %v1124 = vsub.f32 %v907, %v1108
      %v1125 = vsub.f32 %v910, %v1109
      %v1126 = vsub.f32 %v913, %v1110
      %v1127 = vsub.f32 %v916, %v1111
      %v1128 = vsub.f32 %v919, %v1112
      %v1129 = vsub.f32 %v922, %v1113
      %v1130 = vsub.f32 %v925, %v1114
      %v1131 = vsub.f32 %v928, %v1115
      %v1132 = vsub.f32 %v931, %v1116
      %v1133 = vsub.f32 %v934, %v1117
      %v1134 = vmul.f32 %v1118, 1.442695
      %v1135 = vpow.pop %v1134
      %v1136 = vmul.f32 %v1119, 1.442695
      %v1137 = vpow.pop %v1136
      %v1138 = vmul.f32 %v1120, 1.442695
      %v1139 = vpow.pop %v1138
      %v1140 = vmul.f32 %v1121, 1.442695
      %v1141 = vpow.pop %v1140
      %v1142 = vmul.f32 %v1122, 1.442695
      %v1143 = vpow.pop %v1142
      %v1144 = vmul.f32 %v1123, 1.442695
      %v1145 = vpow.pop %v1144
      %v1146 = vmul.f32 %v1124, 1.442695
      %v1147 = vpow.pop %v1146
      %v1148 = vmul.f32 %v1125, 1.442695
      %v1149 = vpow.pop %v1148
      %v1150 = vmul.f32 %v1126, 1.442695
      %v1151 = vpow.pop %v1150
      %v1152 = vmul.f32 %v1127, 1.442695
      %v1153 = vpow.pop %v1152
      %v1154 = vmul.f32 %v1128, 1.442695
      %v1155 = vpow.pop %v1154
      %v1156 = vmul.f32 %v1129, 1.442695
      %v1157 = vpow.pop %v1156
      %v1158 = vmul.f32 %v1130, 1.442695
      %v1159 = vpow.pop %v1158
      %v1160 = vmul.f32 %v1131, 1.442695
      %v1161 = vpow.pop %v1160
      %v1162 = vmul.f32 %v1132, 1.442695
      %v1163 = vpow.pop %v1162
      %v1164 = vmul.f32 %v1133, 1.442695
      %v1165 = vpow.pop %v1164
      %v1166 = vsel %vm936, %v1135, 0.0
      %v1167 = vsel %vm936, %v1137, 0.0
      %v1168 = vsel %vm936, %v1139, 0.0
      %v1169 = vsel %vm936, %v1141, 0.0
      %v1170 = vsel %vm936, %v1143, 0.0
      %v1171 = vsel %vm936, %v1145, 0.0
      %v1172 = vsel %vm936, %v1147, 0.0
      %v1173 = vsel %vm936, %v1149, 0.0
      %v1174 = vsel %vm936, %v1151, 0.0
      %v1175 = vsel %vm936, %v1153, 0.0
      %v1176 = vsel %vm936, %v1155, 0.0
      %v1177 = vsel %vm936, %v1157, 0.0
      %v1178 = vsel %vm936, %v1159, 0.0
      %v1179 = vsel %vm936, %v1161, 0.0
      %v1180 = vsel %vm936, %v1163, 0.0
      %v1181 = vsel %vm936, %v1165, 0.0
      %1182 = vadd.xlane.f32.xlu0 %v1166
      %v1183 = vpop.xlane.xlu0 %1182
      %1184 = vadd.xlane.f32.xlu0 %v1167
      %v1185 = vpop.xlane.xlu0 %1184
      %1186 = vadd.xlane.f32.xlu0 %v1168
      %v1187 = vpop.xlane.xlu0 %1186
      %1188 = vadd.xlane.f32.xlu0 %v1169
      %v1189 = vpop.xlane.xlu0 %1188
      %1190 = vadd.xlane.f32.xlu0 %v1170
      %v1191 = vpop.xlane.xlu0 %1190
      %1192 = vadd.xlane.f32.xlu0 %v1171
      %v1193 = vpop.xlane.xlu0 %1192
      %1194 = vadd.xlane.f32.xlu0 %v1172
      %v1195 = vpop.xlane.xlu0 %1194
      %1196 = vadd.xlane.f32.xlu0 %v1173
      %v1197 = vpop.xlane.xlu0 %1196
      %1198 = vadd.xlane.f32.xlu0 %v1174
      %v1199 = vpop.xlane.xlu0 %1198
      %1200 = vadd.xlane.f32.xlu0 %v1175
      %v1201 = vpop.xlane.xlu0 %1200
      %1202 = vadd.xlane.f32.xlu0 %v1176
      %v1203 = vpop.xlane.xlu0 %1202
      %1204 = vadd.xlane.f32.xlu0 %v1177
      %v1205 = vpop.xlane.xlu0 %1204
      %1206 = vadd.xlane.f32.xlu0 %v1178
      %v1207 = vpop.xlane.xlu0 %1206
      %1208 = vadd.xlane.f32.xlu0 %v1179
      %v1209 = vpop.xlane.xlu0 %1208
      %1210 = vadd.xlane.f32.xlu0 %v1180
      %v1211 = vpop.xlane.xlu0 %1210
      %1212 = vadd.xlane.f32.xlu0 %v1181
      %v1213 = vpop.xlane.xlu0 %1212
      %v1214 = vlog2.pop %v1183
      %v1215 = vmul.f32 %v1214, 0.6931472
      %v1216 = vlog2.pop %v1185
      %v1217 = vmul.f32 %v1216, 0.6931472
      %v1218 = vlog2.pop %v1187
      %v1219 = vmul.f32 %v1218, 0.6931472
      %v1220 = vlog2.pop %v1189
      %v1221 = vmul.f32 %v1220, 0.6931472
      %v1222 = vlog2.pop %v1191
      %v1223 = vmul.f32 %v1222, 0.6931472
      %v1224 = vlog2.pop %v1193
      %v1225 = vmul.f32 %v1224, 0.6931472
      %v1226 = vlog2.pop %v1195
      %v1227 = vmul.f32 %v1226, 0.6931472
      %v1228 = vlog2.pop %v1197
      %v1229 = vmul.f32 %v1228, 0.6931472
      %v1230 = vlog2.pop %v1199
      %v1231 = vmul.f32 %v1230, 0.6931472
      %v1232 = vlog2.pop %v1201
      %v1233 = vmul.f32 %v1232, 0.6931472
      %v1234 = vlog2.pop %v1203
      %v1235 = vmul.f32 %v1234, 0.6931472
      %v1236 = vlog2.pop %v1205
      %v1237 = vmul.f32 %v1236, 0.6931472
      %v1238 = vlog2.pop %v1207
      %v1239 = vmul.f32 %v1238, 0.6931472
      %v1240 = vlog2.pop %v1209
      %v1241 = vmul.f32 %v1240, 0.6931472
      %v1242 = vlog2.pop %v1211
      %v1243 = vmul.f32 %v1242, 0.6931472
      %v1244 = vlog2.pop %v1213
      %v1245 = vmul.f32 %v1244, 0.6931472
      %v1246 = vsel %vm938, %v1135, 0.0
      %v1247 = vsel %vm938, %v1137, 0.0
      %v1248 = vsel %vm938, %v1139, 0.0
      %v1249 = vsel %vm938, %v1141, 0.0
      %v1250 = vsel %vm938, %v1143, 0.0
      %v1251 = vsel %vm938, %v1145, 0.0
      %v1252 = vsel %vm938, %v1147, 0.0
      %v1253 = vsel %vm938, %v1149, 0.0
      %v1254 = vsel %vm938, %v1151, 0.0
      %v1255 = vsel %vm938, %v1153, 0.0
      %v1256 = vsel %vm938, %v1155, 0.0
      %v1257 = vsel %vm938, %v1157, 0.0
      %v1258 = vsel %vm938, %v1159, 0.0
      %v1259 = vsel %vm938, %v1161, 0.0
      %v1260 = vsel %vm938, %v1163, 0.0
      %v1261 = vsel %vm938, %v1165, 0.0
      %1262 = vadd.xlane.f32.xlu0 %v1246
      %v1263 = vpop.xlane.xlu0 %1262
      %1264 = vadd.xlane.f32.xlu0 %v1247
      %v1265 = vpop.xlane.xlu0 %1264
      %1266 = vadd.xlane.f32.xlu0 %v1248
      %v1267 = vpop.xlane.xlu0 %1266
      %1268 = vadd.xlane.f32.xlu0 %v1249
      %v1269 = vpop.xlane.xlu0 %1268
      %1270 = vadd.xlane.f32.xlu0 %v1250
      %v1271 = vpop.xlane.xlu0 %1270
      %1272 = vadd.xlane.f32.xlu0 %v1251
      %v1273 = vpop.xlane.xlu0 %1272
      %1274 = vadd.xlane.f32.xlu0 %v1252
      %v1275 = vpop.xlane.xlu0 %1274
      %1276 = vadd.xlane.f32.xlu0 %v1253
      %v1277 = vpop.xlane.xlu0 %1276
      %1278 = vadd.xlane.f32.xlu0 %v1254
      %v1279 = vpop.xlane.xlu0 %1278
      %1280 = vadd.xlane.f32.xlu0 %v1255
      %v1281 = vpop.xlane.xlu0 %1280
      %1282 = vadd.xlane.f32.xlu0 %v1256
      %v1283 = vpop.xlane.xlu0 %1282
      %1284 = vadd.xlane.f32.xlu0 %v1257
      %v1285 = vpop.xlane.xlu0 %1284
      %1286 = vadd.xlane.f32.xlu0 %v1258
      %v1287 = vpop.xlane.xlu0 %1286
      %1288 = vadd.xlane.f32.xlu0 %v1259
      %v1289 = vpop.xlane.xlu0 %1288
      %1290 = vadd.xlane.f32.xlu0 %v1260
      %v1291 = vpop.xlane.xlu0 %1290
      %1292 = vadd.xlane.f32.xlu0 %v1261
      %v1293 = vpop.xlane.xlu0 %1292
      %v1294 = vlog2.pop %v1263
      %v1295 = vmul.f32 %v1294, 0.6931472
      %v1296 = vlog2.pop %v1265
      %v1297 = vmul.f32 %v1296, 0.6931472
      %v1298 = vlog2.pop %v1267
      %v1299 = vmul.f32 %v1298, 0.6931472
      %v1300 = vlog2.pop %v1269
      %v1301 = vmul.f32 %v1300, 0.6931472
      %v1302 = vlog2.pop %v1271
      %v1303 = vmul.f32 %v1302, 0.6931472
      %v1304 = vlog2.pop %v1273
      %v1305 = vmul.f32 %v1304, 0.6931472
      %v1306 = vlog2.pop %v1275
      %v1307 = vmul.f32 %v1306, 0.6931472
      %v1308 = vlog2.pop %v1277
      %v1309 = vmul.f32 %v1308, 0.6931472
      %v1310 = vlog2.pop %v1279
      %v1311 = vmul.f32 %v1310, 0.6931472
      %v1312 = vlog2.pop %v1281
      %v1313 = vmul.f32 %v1312, 0.6931472
      %v1314 = vlog2.pop %v1283
      %v1315 = vmul.f32 %v1314, 0.6931472
      %v1316 = vlog2.pop %v1285
      %v1317 = vmul.f32 %v1316, 0.6931472
      %v1318 = vlog2.pop %v1287
      %v1319 = vmul.f32 %v1318, 0.6931472
      %v1320 = vlog2.pop %v1289
      %v1321 = vmul.f32 %v1320, 0.6931472
      %v1322 = vlog2.pop %v1291
      %v1323 = vmul.f32 %v1322, 0.6931472
      %v1324 = vlog2.pop %v1293
      %v1325 = vmul.f32 %v1324, 0.6931472
      %v1326 = vsel %vm941, %v1135, 0.0
      %v1327 = vsel %vm941, %v1137, 0.0
      %v1328 = vsel %vm941, %v1139, 0.0
      %v1329 = vsel %vm941, %v1141, 0.0
      %v1330 = vsel %vm941, %v1143, 0.0
      %v1331 = vsel %vm941, %v1145, 0.0
      %v1332 = vsel %vm941, %v1147, 0.0
      %v1333 = vsel %vm941, %v1149, 0.0
      %v1334 = vsel %vm941, %v1151, 0.0
      %v1335 = vsel %vm941, %v1153, 0.0
      %v1336 = vsel %vm941, %v1155, 0.0
      %v1337 = vsel %vm941, %v1157, 0.0
      %v1338 = vsel %vm941, %v1159, 0.0
      %v1339 = vsel %vm941, %v1161, 0.0
      %v1340 = vsel %vm941, %v1163, 0.0
      %v1341 = vsel %vm941, %v1165, 0.0
      %1342 = vadd.xlane.f32.xlu0 %v1326
      %v1343 = vpop.xlane.xlu0 %1342
      %1344 = vadd.xlane.f32.xlu0 %v1327
      %v1345 = vpop.xlane.xlu0 %1344
      %1346 = vadd.xlane.f32.xlu0 %v1328
      %v1347 = vpop.xlane.xlu0 %1346
      %1348 = vadd.xlane.f32.xlu0 %v1329
      %v1349 = vpop.xlane.xlu0 %1348
      %1350 = vadd.xlane.f32.xlu0 %v1330
      %v1351 = vpop.xlane.xlu0 %1350
      %1352 = vadd.xlane.f32.xlu0 %v1331
      %v1353 = vpop.xlane.xlu0 %1352
      %1354 = vadd.xlane.f32.xlu0 %v1332
      %v1355 = vpop.xlane.xlu0 %1354
      %1356 = vadd.xlane.f32.xlu0 %v1333
      %v1357 = vpop.xlane.xlu0 %1356
      %1358 = vadd.xlane.f32.xlu0 %v1334
      %v1359 = vpop.xlane.xlu0 %1358
      %1360 = vadd.xlane.f32.xlu0 %v1335
      %v1361 = vpop.xlane.xlu0 %1360
      %1362 = vadd.xlane.f32.xlu0 %v1336
      %v1363 = vpop.xlane.xlu0 %1362
      %1364 = vadd.xlane.f32.xlu0 %v1337
      %v1365 = vpop.xlane.xlu0 %1364
      %1366 = vadd.xlane.f32.xlu0 %v1338
      %v1367 = vpop.xlane.xlu0 %1366
      %1368 = vadd.xlane.f32.xlu0 %v1339
      %v1369 = vpop.xlane.xlu0 %1368
      %1370 = vadd.xlane.f32.xlu0 %v1340
      %v1371 = vpop.xlane.xlu0 %1370
      %1372 = vadd.xlane.f32.xlu0 %v1341
      %v1373 = vpop.xlane.xlu0 %1372
      %v1374 = vlog2.pop %v1343
      %v1375 = vmul.f32 %v1374, 0.6931472
      %v1376 = vlog2.pop %v1345
      %v1377 = vmul.f32 %v1376, 0.6931472
      %v1378 = vlog2.pop %v1347
      %v1379 = vmul.f32 %v1378, 0.6931472
      %v1380 = vlog2.pop %v1349
      %v1381 = vmul.f32 %v1380, 0.6931472
      %v1382 = vlog2.pop %v1351
      %v1383 = vmul.f32 %v1382, 0.6931472
      %v1384 = vlog2.pop %v1353
      %v1385 = vmul.f32 %v1384, 0.6931472
      %v1386 = vlog2.pop %v1355
      %v1387 = vmul.f32 %v1386, 0.6931472
      %v1388 = vlog2.pop %v1357
      %v1389 = vmul.f32 %v1388, 0.6931472
      %v1390 = vlog2.pop %v1359
      %v1391 = vmul.f32 %v1390, 0.6931472
      %v1392 = vlog2.pop %v1361
      %v1393 = vmul.f32 %v1392, 0.6931472
      %v1394 = vlog2.pop %v1363
      %v1395 = vmul.f32 %v1394, 0.6931472
      %v1396 = vlog2.pop %v1365
      %v1397 = vmul.f32 %v1396, 0.6931472
      %v1398 = vlog2.pop %v1367
      %v1399 = vmul.f32 %v1398, 0.6931472
      %v1400 = vlog2.pop %v1369
      %v1401 = vmul.f32 %v1400, 0.6931472
      %v1402 = vlog2.pop %v1371
      %v1403 = vmul.f32 %v1402, 0.6931472
      %v1404 = vlog2.pop %v1373
      %v1405 = vmul.f32 %v1404, 0.6931472
      %v1406 = vsel %vm938, %v1295, %v1375
      %v1407 = vsel %vm938, %v1297, %v1377
      %v1408 = vsel %vm938, %v1299, %v1379
      %v1409 = vsel %vm938, %v1301, %v1381
      %v1410 = vsel %vm938, %v1303, %v1383
      %v1411 = vsel %vm938, %v1305, %v1385
      %v1412 = vsel %vm938, %v1307, %v1387
      %v1413 = vsel %vm938, %v1309, %v1389
      %v1414 = vsel %vm938, %v1311, %v1391
      %v1415 = vsel %vm938, %v1313, %v1393
      %v1416 = vsel %vm938, %v1315, %v1395
      %v1417 = vsel %vm938, %v1317, %v1397
      %v1418 = vsel %vm938, %v1319, %v1399
      %v1419 = vsel %vm938, %v1321, %v1401
      %v1420 = vsel %vm938, %v1323, %v1403
      %v1421 = vsel %vm938, %v1325, %v1405
      %v1422 = vsel %vm936, %v1215, %v1406
      %v1423 = vsel %vm936, %v1217, %v1407
      %v1424 = vsel %vm936, %v1219, %v1408
      %v1425 = vsel %vm936, %v1221, %v1409
      %v1426 = vsel %vm936, %v1223, %v1410
      %v1427 = vsel %vm936, %v1225, %v1411
      %v1428 = vsel %vm936, %v1227, %v1412
      %v1429 = vsel %vm936, %v1229, %v1413
      %v1430 = vsel %vm936, %v1231, %v1414
      %v1431 = vsel %vm936, %v1233, %v1415
      %v1432 = vsel %vm936, %v1235, %v1416
      %v1433 = vsel %vm936, %v1237, %v1417
      %v1434 = vsel %vm936, %v1239, %v1418
      %v1435 = vsel %vm936, %v1241, %v1419
      %v1436 = vsel %vm936, %v1243, %v1420
      %v1437 = vsel %vm936, %v1245, %v1421
      %v1438 = vsub.f32 %v1118, %v1422
      %v1439 = vsub.f32 %v1119, %v1423
      %v1440 = vsub.f32 %v1120, %v1424
      %v1441 = vsub.f32 %v1121, %v1425
      %v1442 = vsub.f32 %v1122, %v1426
      %v1443 = vsub.f32 %v1123, %v1427
      %v1444 = vsub.f32 %v1124, %v1428
      %v1445 = vsub.f32 %v1125, %v1429
      %v1446 = vsub.f32 %v1126, %v1430
      %v1447 = vsub.f32 %v1127, %v1431
      %v1448 = vsub.f32 %v1128, %v1432
      %v1449 = vsub.f32 %v1129, %v1433
      %v1450 = vsub.f32 %v1130, %v1434
      %v1451 = vsub.f32 %v1131, %v1435
      %v1452 = vsub.f32 %v1132, %v1436
      %v1453 = vsub.f32 %v1133, %v1437
      %1454 = vst [vmem:[%s305] sm:$0xff] %v1438
      %1455 = vst [vmem:[%s305 + $0x8] sm:$0xff] %v1439
      %1456 = vst [vmem:[%s305 + $0x10] sm:$0xff] %v1440
      %1457 = vst [vmem:[%s305 + $0x18] sm:$0xff] %v1441
      %1458 = vst [vmem:[%s305 + $0x20] sm:$0xff] %v1442
      %1459 = vst [vmem:[%s305 + $0x28] sm:$0xff] %v1443
      %1460 = vst [vmem:[%s305 + $0x30] sm:$0xff] %v1444
      %1461 = vst [vmem:[%s305 + $0x38] sm:$0xff] %v1445
      %1462 = vst [vmem:[%s305 + $0x40] sm:$0xff] %v1446
      %1463 = vst [vmem:[%s305 + $0x48] sm:$0xff] %v1447
      %1464 = vst [vmem:[%s305 + $0x50] sm:$0xff] %v1448
      %1465 = vst [vmem:[%s305 + $0x58] sm:$0xff] %v1449
      %1466 = vst [vmem:[%s305 + $0x60] sm:$0xff] %v1450
      %1467 = vst [vmem:[%s305 + $0x68] sm:$0xff] %v1451
      %1468 = vst [vmem:[%s305 + $0x70] sm:$0xff] %v1452
      %1469 = vst [vmem:[%s305 + $0x78] sm:$0xff] %v1453
      %s1470 = smul.u32 16, %s18
      %p1471 = scmp.lt.s32.totalorder %s1470, 31
      %s1472 = scalar_select %p1471, %s1470, 31
      %s1473 = smul.addr %s1472, 8
      %s1474 = scalar_lea.vmem %s7, %s1473
      // Predicated region
      $region49: #{_forward.1} parent=47 // pred_check
        %p1475 = pneg %p193
      $region50: #{_forward.1} parent=47 // pred_check_branch
        %1477 = sbr.rel (%p1475) target = $region52
      $region51: #{_forward.1} parent=47 // pred_region
        %s1478 = smul.u32 16, %s18
      $region52: #{_forward.1} parent=47 // pred_fallthru
        _
    $region48: #{_forward.1} parent=5 // pred_fallthru
      _
    %p1479 = scmp.le.s32.totalorder 2, %s13
    // Predicated region
    $region53: #{_forward.1} parent=5 // pred_check
      %p1480 = pneg %p1479
    $region54: #{_forward.1} parent=5 // pred_check_branch
      %1482 = sbr.rel (%p1480) target = $region56
    $region55: #{_forward.1} parent=5 // pred_region
      %s1483 = ssub.s32 %s13, 2
      // Predicated region
      $region57: #{_forward.1} parent=55 // pred_check
        %p1484 = pneg %p199
      $region58: #{_forward.1} parent=55 // pred_check_branch
        %1486 = sbr.rel (%p1484) target = $region60
      $region59: #{_forward.1} parent=55 // pred_region
        %s1487 = smul.u32 16, %s19
        %p1488 = scmp.lt.s32.totalorder %s1487, 31
        %s1489 = scalar_select %p1488, %s1487, 31
        %s1490 = smul.addr %s1489, 8
        %s1491 = scalar_lea.vmem %s7, %s1490
      $region60: #{_forward.1} parent=55 // pred_fallthru
        _
    $region56: #{_forward.1} parent=5 // pred_fallthru
      _
  $region6: #{_forward.1} parent=0 // loop_footer
    %s17 = sadd.s32 1, %s13
  $region7: #{_forward.1} parent=0 // loop_footer_branch
    %12 = sbr.rel target = $region3
  $region8: #{_forward.1} parent=0 // loop_exit
    _

</llo_original>
